<compile_context>
chip_gen: v7x
topology: tpu7x:2x2x1
jax: 0.10.0
libtpu: 0.0.40
codegen_flags: <defaults>
</compile_context>

<pallas_src>
import numpy as np
import jax
import jax.numpy as jnp
from jax import lax
from jax.experimental import pallas as pl
from jax.experimental.pallas import tpu as pltpu

_LANES = 128


def _round_up(n, m):
    return ((n + m - 1) // m) * m


def _fold_bn(w, conv_b, gamma, beta, mean, var, eps=1e-5):
    """Fold eval-mode BatchNorm into conv weight columns + bias (all f32)."""
    scale = gamma / jnp.sqrt(var + eps)          # (c_out,)
    shift = beta - mean * scale
    return w * scale, scale * conv_b + shift


# ----------------------------------------------------------------------------
# Fused whole-stack kernel. One grid step = `bt` whole sequences (bt*T rows).
# ----------------------------------------------------------------------------
def _make_tcn_kernel(T, kernel_size, has_down_flags):
    k = kernel_size

    def kernel(x_ref, *refs):
        o_ref = refs[-1]
        wrefs = refs[:-1]
        rows = x_ref.shape[0]
        n_seq = rows // T

        # Per-row time index t = row % T, generated in-kernel (no (rows,1) HBM
        # input / lane-sparse VMEM ref). Binary restoring subtraction uses only
        # compare/select/subtract, so it lowers cleanly on the VPU.
        t_idx = lax.broadcasted_iota(jnp.int32, (rows, 1), 0)
        powers = []
        p = 1
        while p < n_seq:
            powers.append(p)
            p *= 2
        for p in reversed(powers):
            t_idx = jnp.where(t_idx >= p * T, t_idx - p * T, t_idx)

        y = x_ref[...].astype(jnp.float32)       # (rows, Cp) activation, f32
        ptr = 0
        for i, has_down in enumerate(has_down_flags):
            d = 2 ** i
            pad = (k - 1) * d
            if has_down:
                w1, b1, w2, b2, wd, bd = wrefs[ptr:ptr + 6]
                ptr += 6
            else:
                w1, b1, w2, b2 = wrefs[ptr:ptr + 4]
                ptr += 4
            mm = w1.dtype                         # matmul-operand dtype

            # Causal masks for this block's dilation, hoisted once and reused
            # by both convs (JAX does not CSE the broadcasts).
            masks = {}
            for j in range(k - 1):
                m = pad - j * d
                if 0 < m < T:
                    masks[j] = (t_idx >= m).astype(jnp.float32)

            def dconv(z, w_ref):
                """Dilated causal conv as ONE fused MXU matmul.

                out[t] = sum_j w[j] . z[t + j*d - pad] (zero for t' < 0): the k
                shifted taps are built with pltpu.roll (XLU) + per-row causal
                mask, concatenated along the lane axis, and contracted against
                the pre-fused (k*Cp_in, Cp_out) weight in a single jnp.dot.
                """
                pieces = []
                for j in range(k):
                    m = pad - j * d               # static left shift per tap
                    if m == 0:
                        pieces.append(z)
                    elif m >= T:                  # tap entirely in the zero pad
                        pieces.append(jnp.zeros_like(z))
                    else:
                        pieces.append(pltpu.roll(z, shift=m, axis=0) * masks[j])
                zcat = jnp.concatenate(pieces, axis=-1) if k > 1 else pieces[0]
                return jnp.dot(zcat.astype(mm), w_ref[...],
                               preferred_element_type=jnp.float32)

            # conv1 (BN1 scale folded into weights) + bias + ReLU
            h = jnp.maximum(dconv(y, w1) + b1[...], 0.0)
            # conv2 (BN2 scale folded into weights) + bias
            out = dconv(h, w2) + b2[...]
            # residual (optional 1x1 downsample) + final ReLU
            if has_down:
                res = jnp.dot(y.astype(mm), wd[...],
                              preferred_element_type=jnp.float32) + bd[...]
            else:
                res = y
            y = jnp.maximum(out + res, 0.0)
            # Dropout layers are identity in eval mode.

        o_ref[...] = y.astype(o_ref.dtype)

    return kernel


# ----------------------------------------------------------------------------
# Parameter preparation: fold BN, pad channels to lane multiples, fuse taps.
# ----------------------------------------------------------------------------
def prepare_params(raw, *, kernel_size, matmul_dtype=jnp.bfloat16, eps=1e-5):
    blocks = []
    for blk in raw["blocks"]:
        _, c_in, c_out = blk["w1"].shape
        cp_in, cp_out = _round_up(c_in, _LANES), _round_up(c_out, _LANES)

        def fuse(w, cpi, cpo):
            kk, ci, co = w.shape
            wp = jnp.zeros((kk, cpi, cpo), jnp.float32).at[:, :ci, :co].set(w)
            return wp.reshape(kk * cpi, cpo).astype(matmul_dtype)

        def padb(b, cpo):
            return jnp.zeros((1, cpo), jnp.float32).at[0, :b.shape[0]].set(b)

        w1, b1 = _fold_bn(blk["w1"], blk["b1"], *blk["bn1"], eps=eps)
        w2, b2 = _fold_bn(blk["w2"], blk["b2"], *blk["bn2"], eps=eps)
        pb = {"w1": fuse(w1, cp_in, cp_out), "b1": padb(b1, cp_out),
              "w2": fuse(w2, cp_out, cp_out), "b2": padb(b2, cp_out),
              "c_in": c_in, "c_out": c_out, "cp_in": cp_in, "cp_out": cp_out}
        if "wd" in blk:
            wd = jnp.zeros((cp_in, cp_out), jnp.float32).at[:c_in, :c_out].set(blk["wd"])
            pb["wd"] = wd.astype(matmul_dtype)
            pb["bd"] = padb(blk["bd"], cp_out)
        blocks.append(pb)
    return {"blocks": blocks, "kernel_size": kernel_size}


# ----------------------------------------------------------------------------
# Full TemporalConvNet forward (PyTorch NCW layout at the boundary).
# ----------------------------------------------------------------------------
def temporal_conv_net(x, params):
    """x: (B, C_in, T) (PyTorch Conv1d NCW layout) -> (B, C_out, T)."""
    blocks = params["blocks"]
    k = params["kernel_size"]
    B, c_in, T = x.shape
    assert c_in == blocks[0]["c_in"]
    cp_in = blocks[0]["cp_in"]
    cp_last, c_last = blocks[-1]["cp_out"], blocks[-1]["c_out"]

    # Channels on the 128-lane axis, (batch, time) folded into matmul rows,
    # channel axis zero-padded to a lane multiple (lane-dense matmuls/stores).
    xt = jnp.transpose(x, (0, 2, 1)).astype(jnp.float32).reshape(B * T, c_in)
    x2d = jnp.zeros((B * T, cp_in), jnp.float32).at[:, :c_in].set(xt)

    # Row tiling: whole sequences per tile (keeps roll+mask causality exact),
    # (8,128)-legal blocks, >=2 "parallel" grid steps when possible (v7x has 2
    # TensorCores), tile size bounded against v7x's smaller VMEM.
    cp_max = max(max(b["cp_in"], b["cp_out"]) for b in blocks)
    bytes_per_row = cp_max * 4 * 8 + k * cp_max * 4 * 2   # io dbl-buf + temps
    max_rows = max(T, (12 << 20) // bytes_per_row)
    cands = [bt for bt in range(1, B + 1)
             if B % bt == 0 and ((bt * T) % 8 == 0 or bt == B)]
    pref = [bt for bt in cands if bt * T <= max_rows and bt < B]
    if not pref:
        pref = [bt for bt in cands if bt * T <= max_rows]
    bt = max(pref) if pref else min(cands)
    G, rows = B // bt, bt * T

    in_specs = [pl.BlockSpec((rows, cp_in), lambda g: (g, 0))]
    args = [x2d]
    has_down = []
    flops = 0
    for b in blocks:
        has_down.append("wd" in b)
        names = ("w1", "b1", "w2", "b2", "wd", "bd") if "wd" in b \
            else ("w1", "b1", "w2", "b2")
        for n in names:
            a = b[n]
            args.append(a)
            in_specs.append(pl.BlockSpec(a.shape, lambda g: (0, 0)))
        flops += 2 * B * T * (k * b["cp_in"] + k * b["cp_out"]) * b["cp_out"]
        if "wd" in b:
            flops += 2 * B * T * b["cp_in"] * b["cp_out"]
    bytes_accessed = int(x2d.size * 4 + B * T * cp_last * 4
                         + sum(int(a.size) * a.dtype.itemsize for a in args[1:]))

    out2d = pl.pallas_call(
        _make_tcn_kernel(T, k, tuple(has_down)),
        grid=(G,),
        in_specs=in_specs,
        out_specs=pl.BlockSpec((rows, cp_last), lambda g: (g, 0)),
        out_shape=jax.ShapeDtypeStruct((B * T, cp_last), jnp.float32),
        compiler_params=pltpu.CompilerParams(dimension_semantics=("parallel",)),
        cost_estimate=pl.CostEstimate(flops=int(flops), transcendentals=0,
                                      bytes_accessed=bytes_accessed),
    )(*args)

    y = out2d[:, :c_last].reshape(B, T, c_last)
    return jnp.transpose(y, (0, 2, 1))


# ----------------------------------------------------------------------------
# Deterministic "raw" (PyTorch-style) parameter init.
# ----------------------------------------------------------------------------
def init_params(key, input_size, num_channels, kernel_size):
    keys = iter(jax.random.split(key, 14 * len(num_channels) + 2))

    def nrm(shape, std=1.0):
        return jax.random.normal(next(keys), shape, jnp.float32) * std

    raw = {"blocks": []}
    c_in = input_size
    for c_out in num_channels:
        blk = {}
        std1 = 1.0 / np.sqrt(c_in * kernel_size)
        blk["w1"] = nrm((kernel_size, c_in, c_out), std1)   # (k, C_in, C_out)
        blk["b1"] = nrm((c_out,), std1)
        blk["bn1"] = (1.0 + 0.1 * nrm((c_out,)), 0.1 * nrm((c_out,)),
                      0.1 * nrm((c_out,)), 1.0 + 0.1 * jnp.abs(nrm((c_out,))))
        std2 = 1.0 / np.sqrt(c_out * kernel_size)
        blk["w2"] = nrm((kernel_size, c_out, c_out), std2)
        blk["b2"] = nrm((c_out,), std2)
        blk["bn2"] = (1.0 + 0.1 * nrm((c_out,)), 0.1 * nrm((c_out,)),
                      0.1 * nrm((c_out,)), 1.0 + 0.1 * jnp.abs(nrm((c_out,))))
        if c_in != c_out:
            stdd = 1.0 / np.sqrt(c_in)
            blk["wd"] = nrm((c_in, c_out), stdd)
            blk["bd"] = nrm((c_out,), stdd)
        raw["blocks"].append(blk)
        c_in = c_out
    return raw


# ----------------------------------------------------------------------------
# Pure-JAX reference (eval-mode, same BN fold, same matmul dtype).
# ----------------------------------------------------------------------------
def reference_forward(x, raw, *, kernel_size, matmul_dtype=jnp.float32, eps=1e-5):
    k, mm = kernel_size, matmul_dtype
    y = jnp.transpose(x, (0, 2, 1)).astype(jnp.float32)     # (B, T, C)
    T = y.shape[1]
    for i, blk in enumerate(raw["blocks"]):
        d = 2 ** i
        pad = (k - 1) * d
        w1, b1 = _fold_bn(blk["w1"], blk["b1"], *blk["bn1"], eps=eps)
        w2, b2 = _fold_bn(blk["w2"], blk["b2"], *blk["bn2"], eps=eps)

        def dconv(z, w, bias):
            zp = jnp.pad(z, ((0, 0), (pad, 0), (0, 0))).astype(mm)
            wc = w.astype(mm)
            acc = sum(jnp.einsum("btc,co->bto", zp[:, j * d:j * d + T, :], wc[j],
                                 preferred_element_type=jnp.float32)
                      for j in range(k))
            return acc + bias

        h = jnp.maximum(dconv(y, w1, b1), 0.0)
        out = dconv(h, w2, b2)
        if "wd" in blk:
            res = jnp.einsum("btc,co->bto", y.astype(mm), blk["wd"].astype(mm),
                             preferred_element_type=jnp.float32) + blk["bd"]
        else:
            res = y
        y = jnp.maximum(out + res, 0.0)
    return jnp.transpose(y, (0, 2, 1))


if __name__ == "__main__":
    # Small shapes: channels [8, 16] exercise both the identity-residual and
    # the 1x1-downsample paths; B=4, T=16 gives a 2-step "parallel" grid.
    B, T = 4, 16
    input_size, num_channels, kernel_size = 8, [8, 16], 3

    key = jax.random.PRNGKey(0)
    kx, kp = jax.random.split(key)
    x = jax.random.normal(kx, (B, input_size, T), jnp.float32)  # NCW like PyTorch
    raw = init_params(kp, input_size, num_channels, kernel_size)

    # f32 matmul operands: validates BN fold, channel padding, causal masks.
    p32 = prepare_params(raw, kernel_size=kernel_size, matmul_dtype=jnp.float32)
    y = jax.block_until_ready(jax.jit(lambda a: temporal_conv_net(a, p32))(x))
    assert y.shape == (B, num_channels[-1], T)
    ref = reference_forward(x, raw, kernel_size=kernel_size,
                            matmul_dtype=jnp.float32)
    np.testing.assert_allclose(np.asarray(y), np.asarray(ref),
                               rtol=2e-2, atol=2e-2)

    # bf16 matmul operands (MXU fast path on v5e/v6e/v7x), f32 accumulation.
    pbf = prepare_params(raw, kernel_size=kernel_size, matmul_dtype=jnp.bfloat16)
    ybf = jax.block_until_ready(jax.jit(lambda a: temporal_conv_net(a, pbf))(x))
    refbf = reference_forward(x, raw, kernel_size=kernel_size,
                              matmul_dtype=jnp.bfloat16)
    np.testing.assert_allclose(np.asarray(ybf), np.asarray(refbf),
                               rtol=2e-2, atol=2e-2)

    print("KERNEL_OK")
</pallas_src>

<mosaic_0001>
module attributes {stable_mosaic.version = 11 : i64} {
  func.func @kernel(%arg0: i32, %arg1: memref<32x128xf32, #tpu.memory_space<vmem>>, %arg2: memref<384x128xf32, #tpu.memory_space<vmem>>, %arg3: memref<1x128xf32, #tpu.memory_space<vmem>>, %arg4: memref<384x128xf32, #tpu.memory_space<vmem>>, %arg5: memref<1x128xf32, #tpu.memory_space<vmem>>, %arg6: memref<384x128xf32, #tpu.memory_space<vmem>>, %arg7: memref<1x128xf32, #tpu.memory_space<vmem>>, %arg8: memref<384x128xf32, #tpu.memory_space<vmem>>, %arg9: memref<1x128xf32, #tpu.memory_space<vmem>>, %arg10: memref<128x128xf32, #tpu.memory_space<vmem>>, %arg11: memref<1x128xf32, #tpu.memory_space<vmem>>, %arg12: memref<32x128xf32, #tpu.memory_space<vmem>>) attributes {dimension_semantics = [#tpu.dimension_semantics<parallel>], iteration_bounds = array<i64: 2>, scalar_prefetch = 0 : i64, scratch_operands = 0 : i64, tpu.core_type = #tpu.core_type<tc>, window_params = [{transform_indices = @transform_0, window_bounds = array<i64: 32, 128>}, {pipeline_mode = #tpu.pipeline_mode<synchronous>, transform_indices = @transform_1, window_bounds = array<i64: 384, 128>}, {pipeline_mode = #tpu.pipeline_mode<synchronous>, transform_indices = @transform_2, window_bounds = array<i64: 1, 128>}, {pipeline_mode = #tpu.pipeline_mode<synchronous>, transform_indices = @transform_3, window_bounds = array<i64: 384, 128>}, {pipeline_mode = #tpu.pipeline_mode<synchronous>, transform_indices = @transform_4, window_bounds = array<i64: 1, 128>}, {pipeline_mode = #tpu.pipeline_mode<synchronous>, transform_indices = @transform_5, window_bounds = array<i64: 384, 128>}, {pipeline_mode = #tpu.pipeline_mode<synchronous>, transform_indices = @transform_6, window_bounds = array<i64: 1, 128>}, {pipeline_mode = #tpu.pipeline_mode<synchronous>, transform_indices = @transform_7, window_bounds = array<i64: 384, 128>}, {pipeline_mode = #tpu.pipeline_mode<synchronous>, transform_indices = @transform_8, window_bounds = array<i64: 1, 128>}, {pipeline_mode = #tpu.pipeline_mode<synchronous>, transform_indices = @transform_9, window_bounds = array<i64: 128, 128>}, {pipeline_mode = #tpu.pipeline_mode<synchronous>, transform_indices = @transform_10, window_bounds = array<i64: 1, 128>}, {transform_indices = @transform_11, window_bounds = array<i64: 32, 128>}]} {
    %0 = tpu.iota {dimensions = array<i32: 0>} : vector<32x1xi32>
    %c16_i32 = arith.constant 16 : i32
    %1 = vector.broadcast %c16_i32 : i32 to vector<32x1xi32>
    %2 = arith.cmpi sge, %0, %1 : vector<32x1xi32>
    %c16_i32_0 = arith.constant 16 : i32
    %3 = vector.broadcast %c16_i32_0 : i32 to vector<32x1xi32>
    %4 = arith.subi %0, %3 : vector<32x1xi32>
    %5 = arith.select %2, %4, %0 : vector<32x1xi1>, vector<32x1xi32>
    %c0 = arith.constant 0 : index
    %c0_1 = arith.constant 0 : index
    %6 = vector.load %arg1[%c0, %c0_1] : memref<32x128xf32, #tpu.memory_space<vmem>>, vector<32x128xf32>
    %c2_i32 = arith.constant 2 : i32
    %7 = vector.broadcast %c2_i32 : i32 to vector<32x1xi32>
    %8 = arith.cmpi sge, %5, %7 : vector<32x1xi32>
    %9 = arith.extui %8 : vector<32x1xi1> to vector<32x1xi32>
    %10 = arith.sitofp %9 : vector<32x1xi32> to vector<32x1xf32>
    %c1_i32 = arith.constant 1 : i32
    %11 = vector.broadcast %c1_i32 : i32 to vector<32x1xi32>
    %12 = arith.cmpi sge, %5, %11 : vector<32x1xi32>
    %13 = arith.extui %12 : vector<32x1xi1> to vector<32x1xi32>
    %14 = arith.sitofp %13 : vector<32x1xi32> to vector<32x1xf32>
    %c2_i32_2 = arith.constant 2 : i32
    %15 = tpu.dynamic_rotate %6 by %c2_i32_2 dim 0 : vector<32x128xf32>, i32 -> vector<32x128xf32>
    %16 = vector.broadcast %10 : vector<32x1xf32> to vector<32x128xf32>
    %17 = arith.mulf %15, %16 : vector<32x128xf32>
    %c1_i32_3 = arith.constant 1 : i32
    %18 = tpu.dynamic_rotate %6 by %c1_i32_3 dim 0 : vector<32x128xf32>, i32 -> vector<32x128xf32>
    %19 = vector.broadcast %14 : vector<32x1xf32> to vector<32x128xf32>
    %20 = arith.mulf %18, %19 : vector<32x128xf32>
    %21 = tpu.concatenate %17, %20, %6 in 1 : vector<32x128xf32>, vector<32x128xf32>, vector<32x128xf32> -> vector<32x384xf32>
    %c0_4 = arith.constant 0 : index
    %c0_5 = arith.constant 0 : index
    %22 = vector.load %arg2[%c0_4, %c0_5] : memref<384x128xf32, #tpu.memory_space<vmem>>, vector<384x128xf32>
    %cst = arith.constant dense<0.000000e+00> : vector<32x128xf32>
    %23 = tpu.matmul %21, %22, %cst {dimension_numbers = #tpu.dot_dimension_numbers<[1], [0], [0], [1], [0, 0, 1, 1], [], []>} : vector<32x384xf32>, vector<384x128xf32>, vector<32x128xf32> -> vector<32x128xf32>
    %c0_6 = arith.constant 0 : index
    %c0_7 = arith.constant 0 : index
    %24 = vector.load %arg3[%c0_6, %c0_7] : memref<1x128xf32, #tpu.memory_space<vmem>>, vector<1x128xf32>
    %25 = vector.broadcast %24 : vector<1x128xf32> to vector<32x128xf32>
    %26 = arith.addf %23, %25 : vector<32x128xf32>
    %cst_8 = arith.constant 0.000000e+00 : f32
    %27 = vector.broadcast %cst_8 : f32 to vector<32x128xf32>
    %28 = arith.maximumf %26, %27 : vector<32x128xf32>
    %c2_i32_9 = arith.constant 2 : i32
    %29 = tpu.dynamic_rotate %28 by %c2_i32_9 dim 0 : vector<32x128xf32>, i32 -> vector<32x128xf32>
    %30 = vector.broadcast %10 : vector<32x1xf32> to vector<32x128xf32>
    %31 = arith.mulf %29, %30 : vector<32x128xf32>
    %c1_i32_10 = arith.constant 1 : i32
    %32 = tpu.dynamic_rotate %28 by %c1_i32_10 dim 0 : vector<32x128xf32>, i32 -> vector<32x128xf32>
    %33 = vector.broadcast %14 : vector<32x1xf32> to vector<32x128xf32>
    %34 = arith.mulf %32, %33 : vector<32x128xf32>
    %35 = tpu.concatenate %31, %34, %28 in 1 : vector<32x128xf32>, vector<32x128xf32>, vector<32x128xf32> -> vector<32x384xf32>
    %c0_11 = arith.constant 0 : index
    %c0_12 = arith.constant 0 : index
    %36 = vector.load %arg4[%c0_11, %c0_12] : memref<384x128xf32, #tpu.memory_space<vmem>>, vector<384x128xf32>
    %cst_13 = arith.constant dense<0.000000e+00> : vector<32x128xf32>
    %37 = tpu.matmul %35, %36, %cst_13 {dimension_numbers = #tpu.dot_dimension_numbers<[1], [0], [0], [1], [0, 0, 1, 1], [], []>} : vector<32x384xf32>, vector<384x128xf32>, vector<32x128xf32> -> vector<32x128xf32>
    %c0_14 = arith.constant 0 : index
    %c0_15 = arith.constant 0 : index
    %38 = vector.load %arg5[%c0_14, %c0_15] : memref<1x128xf32, #tpu.memory_space<vmem>>, vector<1x128xf32>
    %39 = vector.broadcast %38 : vector<1x128xf32> to vector<32x128xf32>
    %40 = arith.addf %37, %39 : vector<32x128xf32>
    %41 = arith.addf %40, %6 : vector<32x128xf32>
    %cst_16 = arith.constant 0.000000e+00 : f32
    %42 = vector.broadcast %cst_16 : f32 to vector<32x128xf32>
    %43 = arith.maximumf %41, %42 : vector<32x128xf32>
    %c4_i32 = arith.constant 4 : i32
    %44 = vector.broadcast %c4_i32 : i32 to vector<32x1xi32>
    %45 = arith.cmpi sge, %5, %44 : vector<32x1xi32>
    %46 = arith.extui %45 : vector<32x1xi1> to vector<32x1xi32>
    %47 = arith.sitofp %46 : vector<32x1xi32> to vector<32x1xf32>
    %c2_i32_17 = arith.constant 2 : i32
    %48 = vector.broadcast %c2_i32_17 : i32 to vector<32x1xi32>
    %49 = arith.cmpi sge, %5, %48 : vector<32x1xi32>
    %50 = arith.extui %49 : vector<32x1xi1> to vector<32x1xi32>
    %51 = arith.sitofp %50 : vector<32x1xi32> to vector<32x1xf32>
    %c4_i32_18 = arith.constant 4 : i32
    %52 = tpu.dynamic_rotate %43 by %c4_i32_18 dim 0 : vector<32x128xf32>, i32 -> vector<32x128xf32>
    %53 = vector.broadcast %47 : vector<32x1xf32> to vector<32x128xf32>
    %54 = arith.mulf %52, %53 : vector<32x128xf32>
    %c2_i32_19 = arith.constant 2 : i32
    %55 = tpu.dynamic_rotate %43 by %c2_i32_19 dim 0 : vector<32x128xf32>, i32 -> vector<32x128xf32>
    %56 = vector.broadcast %51 : vector<32x1xf32> to vector<32x128xf32>
    %57 = arith.mulf %55, %56 : vector<32x128xf32>
    %58 = tpu.concatenate %54, %57, %43 in 1 : vector<32x128xf32>, vector<32x128xf32>, vector<32x128xf32> -> vector<32x384xf32>
    %c0_20 = arith.constant 0 : index
    %c0_21 = arith.constant 0 : index
    %59 = vector.load %arg6[%c0_20, %c0_21] : memref<384x128xf32, #tpu.memory_space<vmem>>, vector<384x128xf32>
    %cst_22 = arith.constant dense<0.000000e+00> : vector<32x128xf32>
    %60 = tpu.matmul %58, %59, %cst_22 {dimension_numbers = #tpu.dot_dimension_numbers<[1], [0], [0], [1], [0, 0, 1, 1], [], []>} : vector<32x384xf32>, vector<384x128xf32>, vector<32x128xf32> -> vector<32x128xf32>
    %c0_23 = arith.constant 0 : index
    %c0_24 = arith.constant 0 : index
    %61 = vector.load %arg7[%c0_23, %c0_24] : memref<1x128xf32, #tpu.memory_space<vmem>>, vector<1x128xf32>
    %62 = vector.broadcast %61 : vector<1x128xf32> to vector<32x128xf32>
    %63 = arith.addf %60, %62 : vector<32x128xf32>
    %cst_25 = arith.constant 0.000000e+00 : f32
    %64 = vector.broadcast %cst_25 : f32 to vector<32x128xf32>
    %65 = arith.maximumf %63, %64 : vector<32x128xf32>
    %c4_i32_26 = arith.constant 4 : i32
    %66 = tpu.dynamic_rotate %65 by %c4_i32_26 dim 0 : vector<32x128xf32>, i32 -> vector<32x128xf32>
    %67 = vector.broadcast %47 : vector<32x1xf32> to vector<32x128xf32>
    %68 = arith.mulf %66, %67 : vector<32x128xf32>
    %c2_i32_27 = arith.constant 2 : i32
    %69 = tpu.dynamic_rotate %65 by %c2_i32_27 dim 0 : vector<32x128xf32>, i32 -> vector<32x128xf32>
    %70 = vector.broadcast %51 : vector<32x1xf32> to vector<32x128xf32>
    %71 = arith.mulf %69, %70 : vector<32x128xf32>
    %72 = tpu.concatenate %68, %71, %65 in 1 : vector<32x128xf32>, vector<32x128xf32>, vector<32x128xf32> -> vector<32x384xf32>
    %c0_28 = arith.constant 0 : index
    %c0_29 = arith.constant 0 : index
    %73 = vector.load %arg8[%c0_28, %c0_29] : memref<384x128xf32, #tpu.memory_space<vmem>>, vector<384x128xf32>
    %cst_30 = arith.constant dense<0.000000e+00> : vector<32x128xf32>
    %74 = tpu.matmul %72, %73, %cst_30 {dimension_numbers = #tpu.dot_dimension_numbers<[1], [0], [0], [1], [0, 0, 1, 1], [], []>} : vector<32x384xf32>, vector<384x128xf32>, vector<32x128xf32> -> vector<32x128xf32>
    %c0_31 = arith.constant 0 : index
    %c0_32 = arith.constant 0 : index
    %75 = vector.load %arg9[%c0_31, %c0_32] : memref<1x128xf32, #tpu.memory_space<vmem>>, vector<1x128xf32>
    %76 = vector.broadcast %75 : vector<1x128xf32> to vector<32x128xf32>
    %77 = arith.addf %74, %76 : vector<32x128xf32>
    %c0_33 = arith.constant 0 : index
    %c0_34 = arith.constant 0 : index
    %78 = vector.load %arg10[%c0_33, %c0_34] : memref<128x128xf32, #tpu.memory_space<vmem>>, vector<128x128xf32>
    %cst_35 = arith.constant dense<0.000000e+00> : vector<32x128xf32>
    %79 = tpu.matmul %43, %78, %cst_35 {dimension_numbers = #tpu.dot_dimension_numbers<[1], [0], [0], [1], [0, 0, 1, 1], [], []>} : vector<32x128xf32>, vector<128x128xf32>, vector<32x128xf32> -> vector<32x128xf32>
    %c0_36 = arith.constant 0 : index
    %c0_37 = arith.constant 0 : index
    %80 = vector.load %arg11[%c0_36, %c0_37] : memref<1x128xf32, #tpu.memory_space<vmem>>, vector<1x128xf32>
    %81 = vector.broadcast %80 : vector<1x128xf32> to vector<32x128xf32>
    %82 = arith.addf %79, %81 : vector<32x128xf32>
    %83 = arith.addf %77, %82 : vector<32x128xf32>
    %cst_38 = arith.constant 0.000000e+00 : f32
    %84 = vector.broadcast %cst_38 : f32 to vector<32x128xf32>
    %85 = arith.maximumf %83, %84 : vector<32x128xf32>
    %c0_39 = arith.constant 0 : index
    %c0_40 = arith.constant 0 : index
    %86 = vector.load %arg12[%c0_39, %c0_40] : memref<32x128xf32, #tpu.memory_space<vmem>>, vector<32x128xf32>
    tpu.vector_store %arg12[%c0_39, %c0_40], %85 {strides = array<i32>} : memref<32x128xf32, #tpu.memory_space<vmem>>, vector<32x128xf32>,
    return
  }
  func.func @transform_0(%arg0: i32) -> (i32, i32) {
    %c0_i32 = arith.constant 0 : i32
    %c0_i32_0 = arith.constant 0 : i32
    return %arg0, %c0_i32 : i32, i32
  }
  func.func @transform_1(%arg0: i32) -> (i32, i32) {
    %c0_i32 = arith.constant 0 : i32
    %c0_i32_0 = arith.constant 0 : i32
    %c0_i32_1 = arith.constant 0 : i32
    return %c0_i32, %c0_i32_0 : i32, i32
  }
  func.func @transform_2(%arg0: i32) -> (i32, i32) {
    %c0_i32 = arith.constant 0 : i32
    %c0_i32_0 = arith.constant 0 : i32
    %c0_i32_1 = arith.constant 0 : i32
    return %c0_i32, %c0_i32_0 : i32, i32
  }
  func.func @transform_3(%arg0: i32) -> (i32, i32) {
    %c0_i32 = arith.constant 0 : i32
    %c0_i32_0 = arith.constant 0 : i32
    %c0_i32_1 = arith.constant 0 : i32
    return %c0_i32, %c0_i32_0 : i32, i32
  }
  func.func @transform_4(%arg0: i32) -> (i32, i32) {
    %c0_i32 = arith.constant 0 : i32
    %c0_i32_0 = arith.constant 0 : i32
    %c0_i32_1 = arith.constant 0 : i32
    return %c0_i32, %c0_i32_0 : i32, i32
  }
  func.func @transform_5(%arg0: i32) -> (i32, i32) {
    %c0_i32 = arith.constant 0 : i32
    %c0_i32_0 = arith.constant 0 : i32
    %c0_i32_1 = arith.constant 0 : i32
    return %c0_i32, %c0_i32_0 : i32, i32
  }
  func.func @transform_6(%arg0: i32) -> (i32, i32) {
    %c0_i32 = arith.constant 0 : i32
    %c0_i32_0 = arith.constant 0 : i32
    %c0_i32_1 = arith.constant 0 : i32
    return %c0_i32, %c0_i32_0 : i32, i32
  }
  func.func @transform_7(%arg0: i32) -> (i32, i32) {
    %c0_i32 = arith.constant 0 : i32
    %c0_i32_0 = arith.constant 0 : i32
    %c0_i32_1 = arith.constant 0 : i32
    return %c0_i32, %c0_i32_0 : i32, i32
  }
  func.func @transform_8(%arg0: i32) -> (i32, i32) {
    %c0_i32 = arith.constant 0 : i32
    %c0_i32_0 = arith.constant 0 : i32
    %c0_i32_1 = arith.constant 0 : i32
    return %c0_i32, %c0_i32_0 : i32, i32
  }
  func.func @transform_9(%arg0: i32) -> (i32, i32) {
    %c0_i32 = arith.constant 0 : i32
    %c0_i32_0 = arith.constant 0 : i32
    %c0_i32_1 = arith.constant 0 : i32
    return %c0_i32, %c0_i32_0 : i32, i32
  }
  func.func @transform_10(%arg0: i32) -> (i32, i32) {
    %c0_i32 = arith.constant 0 : i32
    %c0_i32_0 = arith.constant 0 : i32
    %c0_i32_1 = arith.constant 0 : i32
    return %c0_i32, %c0_i32_0 : i32, i32
  }
  func.func @transform_11(%arg0: i32) -> (i32, i32) {
    %c0_i32 = arith.constant 0 : i32
    %c0_i32_0 = arith.constant 0 : i32
    return %arg0, %c0_i32 : i32, i32
  }
}

</mosaic_0001>

<llo_original>
// kernel: _lambda_.1
$region0: #{_lambda_.1}
  #allocation0 [shape = 'u32[]', space=smem, size = 0x4, offset = 0x4, fixed_abs, tag = 'smem constant byte address 0x4 - core index']
  #allocation1 [shape = 'u32[144,128]{1,0:T(1,128)}', space=vmem, size = 0x12000, scoped, tag = 'internal scratch']
  %s0 = inlined_call_operand.vmem [shape: f32[64,128], index: 0, kind: input, shape index: {}]
  %s1 = inlined_call_operand.hbm [shape: f32[384,128], index: 1, kind: input, shape index: {}]
  %s2 = inlined_call_operand.vmem [shape: f32[1,128], index: 2, kind: input, shape index: {}]
  %s3 = inlined_call_operand.hbm [shape: f32[384,128], index: 3, kind: input, shape index: {}]
  %s4 = inlined_call_operand.vmem [shape: f32[1,128], index: 4, kind: input, shape index: {}]
  %s5 = inlined_call_operand.hbm [shape: f32[384,128], index: 5, kind: input, shape index: {}]
  %s6 = inlined_call_operand.vmem [shape: f32[1,128], index: 6, kind: input, shape index: {}]
  %s7 = inlined_call_operand.hbm [shape: f32[384,128], index: 7, kind: input, shape index: {}]
  %s8 = inlined_call_operand.vmem [shape: f32[1,128], index: 8, kind: input, shape index: {}]
  %s9 = inlined_call_operand.vmem [shape: f32[128,128], index: 9, kind: input, shape index: {}]
  %s10 = inlined_call_operand.vmem [shape: f32[1,128], index: 10, kind: input, shape index: {}]
  %s11 = inlined_call_operand.vmem [shape: f32[64,128], index: 11, kind: output, shape index: {}]
  %s12 = sld [smem:[#allocation0]]
  $region93: #{_lambda_.1} parent=0
    _
  %s14 = ssub.s32 1, %s12
  %s15 = scalar_select 0, %s14, %s12
  $region1: #{_lambda_.1} parent=0
    #allocation2 [shape = 'u8[196608]{0}', space=vmem, size = 0x30000, scoped, tag = 'input window, operand 1, single buffered']
    #allocation3 [shape = 's32[2]{0}', space=sflag, size = 0x8, scoped, tag = 'scoped memory for _lambda_.1']
    #allocation4 [shape = 'u8[196608]{0}', space=vmem, size = 0x30000, scoped, tag = 'input window, operand 3, single buffered']
    #allocation5 [shape = 's32[1]{0}', space=sflag, size = 0x4, scoped, tag = 'scoped memory for _lambda_.1']
    #allocation6 [shape = 'u8[196608]{0}', space=vmem, size = 0x30000, scoped, tag = 'input window, operand 5, single buffered']
    #allocation7 [shape = 'u8[196608]{0}', space=vmem, size = 0x30000, scoped, tag = 'input window, operand 7, single buffered']
    #allocation8 [shape = 's32[1]{0}', space=sflag, size = 0x4, scoped, tag = 'scoped memory for _lambda_.1']
    %16 = vsyncpa [#allocation3], 0
    %17 = vsyncpa [#allocation5], 0
    %18 = vsyncpa [#allocation8], 0
    loop: start=0, step=1, limit=4
    $region2: #{_lambda_.1} parent=1 // loop_pre_header
      _
    $region3: #{_lambda_.1} parent=1 // loop_header
      %s20 = sphi 0, %s24
      %p21 = scmp.ge.s32.totalorder %s20, 4
      %s30 = sphi 0, %s32
      %s33 = sphi 0, %s30
      %s34 = sphi 0, %s33
      %s50 = sphi 0, %s34
      %s54 = sphi 0, %s54
      %s56 = sphi 0, %s54
      %s57 = sphi 0, %s56
      %s71 = sphi 0, %s57
      %s75 = sphi 0, %s75
      %s77 = sphi 0, %s75
      %s78 = sphi 0, %s77
      %s92 = sphi 0, %s78
      %s96 = sphi 0, %s96
      %s98 = sphi 0, %s96
      %s99 = sphi 0, %s98
      %s113 = sphi 0, %s99
      %s117 = sphi 0, %s117
      %s119 = sphi 0, %s117
      %s120 = sphi 0, %s119
      %s134 = sphi 0, %s120
      %s138 = sphi 0, %s138
      %s140 = sphi 0, %s138
      %s141 = sphi 0, %s140
      %s155 = sphi 0, %s141
      %s159 = sphi 0, %s159
      %s161 = sphi 0, %s159
      %s162 = sphi 0, %s161
      %s176 = sphi 0, %s162
      %s180 = sphi 0, %s180
      %s182 = sphi 0, %s180
      %s183 = sphi 0, %s182
      %s197 = sphi 0, %s183
      %s201 = sphi 0, %s201
      %s203 = sphi 0, %s201
      %s204 = sphi 0, %s203
      %s218 = sphi 0, %s204
      %s222 = sphi 0, %s222
      %s224 = sphi 0, %s222
      %s225 = sphi 0, %s224
      %s239 = sphi 0, %s225
      %s243 = sphi 0, %s243
      %s245 = sphi 0, %s243
      %s246 = sphi 0, %s245
      %s260 = sphi 0, %s246
      %s266 = sphi 0, %s268
      %s269 = sphi 0, %s266
      %s270 = sphi 0, %s269
      %s286 = sphi 0, %s270
    $region4: #{_lambda_.1} parent=1 // loop_header_branch
      %23 = sbr.rel (%p21) target = $region8
    $region5: #{_lambda_.1} parent=1 // loop_body
      %s25 = ssub.s32 %s20, 1
      %s26 = ssub.s32 %s20, 2
      %s27 = sadd.s32 %s20, 1
      %s28 = ssub.s32 %s20, %s27
      %p29 = scmp.eq.s32.totalorder %s28, 0
      %s31 = sadd.s32 %s30, 1
      %s32 = scalar_select %p29, %s30, %s31
      %p35 = pneg %p29
      %p36 = scmp.eq.s32.totalorder %s20, 1
      %p37 = por %p35, %p36
      %p38 = scmp.ne.s32.totalorder %s30, %s33
      %p39 = scmp.eq.s32.totalorder %s20, 0
      %p40 = por %p38, %p39
      %p41 = scmp.ne.s32.totalorder %s30, %s33
      %p42 = scmp.eq.s32.totalorder %s25, 1
      %p43 = por %p41, %p42
      %p44 = scmp.ne.s32.totalorder %s33, %s34
      %p45 = scmp.eq.s32.totalorder %s25, 0
      %p46 = por %p44, %p45
      %p47 = scmp.ne.s32.totalorder %s33, %s34
      %p48 = scmp.eq.s32.totalorder %s26, 1
      %p49 = por %p47, %p48
      %p51 = scmp.ne.s32.totalorder %s34, %s50
      %p52 = scmp.eq.s32.totalorder %s26, 0
      %p53 = por %p51, %p52
      %s55 = sadd.s32 %s54, 1
      %p58 = scmp.eq.s32.totalorder %s20, 1
      %p59 = scmp.ne.s32.totalorder %s54, %s56
      %p60 = scmp.eq.s32.totalorder %s20, 0
      %p61 = por %p59, %p60
      %p62 = scmp.ne.s32.totalorder %s54, %s56
      %p63 = scmp.eq.s32.totalorder %s25, 1
      %p64 = por %p62, %p63
      %p65 = scmp.ne.s32.totalorder %s56, %s57
      %p66 = scmp.eq.s32.totalorder %s25, 0
      %p67 = por %p65, %p66
      %p68 = scmp.ne.s32.totalorder %s56, %s57
      %p69 = scmp.eq.s32.totalorder %s26, 1
      %p70 = por %p68, %p69
      %p72 = scmp.ne.s32.totalorder %s57, %s71
      %p73 = scmp.eq.s32.totalorder %s26, 0
      %p74 = por %p72, %p73
      %s76 = sadd.s32 %s75, 1
      %p79 = scmp.eq.s32.totalorder %s20, 1
      %p80 = scmp.ne.s32.totalorder %s75, %s77
      %p81 = scmp.eq.s32.totalorder %s20, 0
      %p82 = por %p80, %p81
      %p83 = scmp.ne.s32.totalorder %s75, %s77
      %p84 = scmp.eq.s32.totalorder %s25, 1
      %p85 = por %p83, %p84
      %p86 = scmp.ne.s32.totalorder %s77, %s78
      %p87 = scmp.eq.s32.totalorder %s25, 0
      %p88 = por %p86, %p87
      %p89 = scmp.ne.s32.totalorder %s77, %s78
      %p90 = scmp.eq.s32.totalorder %s26, 1
      %p91 = por %p89, %p90
      %p93 = scmp.ne.s32.totalorder %s78, %s92
      %p94 = scmp.eq.s32.totalorder %s26, 0
      %p95 = por %p93, %p94
      %s97 = sadd.s32 %s96, 1
      %p100 = scmp.eq.s32.totalorder %s20, 1
      %p101 = scmp.ne.s32.totalorder %s96, %s98
      %p102 = scmp.eq.s32.totalorder %s20, 0
      %p103 = por %p101, %p102
      %p104 = scmp.ne.s32.totalorder %s96, %s98
      %p105 = scmp.eq.s32.totalorder %s25, 1
      %p106 = por %p104, %p105
      %p107 = scmp.ne.s32.totalorder %s98, %s99
      %p108 = scmp.eq.s32.totalorder %s25, 0
      %p109 = por %p107, %p108
      %p110 = scmp.ne.s32.totalorder %s98, %s99
      %p111 = scmp.eq.s32.totalorder %s26, 1
      %p112 = por %p110, %p111
      %p114 = scmp.ne.s32.totalorder %s99, %s113
      %p115 = scmp.eq.s32.totalorder %s26, 0
      %p116 = por %p114, %p115
      %s118 = sadd.s32 %s117, 1
      %p121 = scmp.eq.s32.totalorder %s20, 1
      %p122 = scmp.ne.s32.totalorder %s117, %s119
      %p123 = scmp.eq.s32.totalorder %s20, 0
      %p124 = por %p122, %p123
      %p125 = scmp.ne.s32.totalorder %s117, %s119
      %p126 = scmp.eq.s32.totalorder %s25, 1
      %p127 = por %p125, %p126
      %p128 = scmp.ne.s32.totalorder %s119, %s120
      %p129 = scmp.eq.s32.totalorder %s25, 0
      %p130 = por %p128, %p129
      %p131 = scmp.ne.s32.totalorder %s119, %s120
      %p132 = scmp.eq.s32.totalorder %s26, 1
      %p133 = por %p131, %p132
      %p135 = scmp.ne.s32.totalorder %s120, %s134
      %p136 = scmp.eq.s32.totalorder %s26, 0
      %p137 = por %p135, %p136
      %s139 = sadd.s32 %s138, 1
      %p142 = scmp.eq.s32.totalorder %s20, 1
      %p143 = scmp.ne.s32.totalorder %s138, %s140
      %p144 = scmp.eq.s32.totalorder %s20, 0
      %p145 = por %p143, %p144
      %p146 = scmp.ne.s32.totalorder %s138, %s140
      %p147 = scmp.eq.s32.totalorder %s25, 1
      %p148 = por %p146, %p147
      %p149 = scmp.ne.s32.totalorder %s140, %s141
      %p150 = scmp.eq.s32.totalorder %s25, 0
      %p151 = por %p149, %p150
      %p152 = scmp.ne.s32.totalorder %s140, %s141
      %p153 = scmp.eq.s32.totalorder %s26, 1
      %p154 = por %p152, %p153
      %p156 = scmp.ne.s32.totalorder %s141, %s155
      %p157 = scmp.eq.s32.totalorder %s26, 0
      %p158 = por %p156, %p157
      %s160 = sadd.s32 %s159, 1
      %p163 = scmp.eq.s32.totalorder %s20, 1
      %p164 = scmp.ne.s32.totalorder %s159, %s161
      %p165 = scmp.eq.s32.totalorder %s20, 0
      %p166 = por %p164, %p165
      %p167 = scmp.ne.s32.totalorder %s159, %s161
      %p168 = scmp.eq.s32.totalorder %s25, 1
      %p169 = por %p167, %p168
      %p170 = scmp.ne.s32.totalorder %s161, %s162
      %p171 = scmp.eq.s32.totalorder %s25, 0
      %p172 = por %p170, %p171
      %p173 = scmp.ne.s32.totalorder %s161, %s162
      %p174 = scmp.eq.s32.totalorder %s26, 1
      %p175 = por %p173, %p174
      %p177 = scmp.ne.s32.totalorder %s162, %s176
      %p178 = scmp.eq.s32.totalorder %s26, 0
      %p179 = por %p177, %p178
      %s181 = sadd.s32 %s180, 1
      %p184 = scmp.eq.s32.totalorder %s20, 1
      %p185 = scmp.ne.s32.totalorder %s180, %s182
      %p186 = scmp.eq.s32.totalorder %s20, 0
      %p187 = por %p185, %p186
      %p188 = scmp.ne.s32.totalorder %s180, %s182
      %p189 = scmp.eq.s32.totalorder %s25, 1
      %p190 = por %p188, %p189
      %p191 = scmp.ne.s32.totalorder %s182, %s183
      %p192 = scmp.eq.s32.totalorder %s25, 0
      %p193 = por %p191, %p192
      %p194 = scmp.ne.s32.totalorder %s182, %s183
      %p195 = scmp.eq.s32.totalorder %s26, 1
      %p196 = por %p194, %p195
      %p198 = scmp.ne.s32.totalorder %s183, %s197
      %p199 = scmp.eq.s32.totalorder %s26, 0
      %p200 = por %p198, %p199
      %s202 = sadd.s32 %s201, 1
      %p205 = scmp.eq.s32.totalorder %s20, 1
      %p206 = scmp.ne.s32.totalorder %s201, %s203
      %p207 = scmp.eq.s32.totalorder %s20, 0
      %p208 = por %p206, %p207
      %p209 = scmp.ne.s32.totalorder %s201, %s203
      %p210 = scmp.eq.s32.totalorder %s25, 1
      %p211 = por %p209, %p210
      %p212 = scmp.ne.s32.totalorder %s203, %s204
      %p213 = scmp.eq.s32.totalorder %s25, 0
      %p214 = por %p212, %p213
      %p215 = scmp.ne.s32.totalorder %s203, %s204
      %p216 = scmp.eq.s32.totalorder %s26, 1
      %p217 = por %p215, %p216
      %p219 = scmp.ne.s32.totalorder %s204, %s218
      %p220 = scmp.eq.s32.totalorder %s26, 0
      %p221 = por %p219, %p220
      %s223 = sadd.s32 %s222, 1
      %p226 = scmp.eq.s32.totalorder %s20, 1
      %p227 = scmp.ne.s32.totalorder %s222, %s224
      %p228 = scmp.eq.s32.totalorder %s20, 0
      %p229 = por %p227, %p228
      %p230 = scmp.ne.s32.totalorder %s222, %s224
      %p231 = scmp.eq.s32.totalorder %s25, 1
      %p232 = por %p230, %p231
      %p233 = scmp.ne.s32.totalorder %s224, %s225
      %p234 = scmp.eq.s32.totalorder %s25, 0
      %p235 = por %p233, %p234
      %p236 = scmp.ne.s32.totalorder %s224, %s225
      %p237 = scmp.eq.s32.totalorder %s26, 1
      %p238 = por %p236, %p237
      %p240 = scmp.ne.s32.totalorder %s225, %s239
      %p241 = scmp.eq.s32.totalorder %s26, 0
      %p242 = por %p240, %p241
      %s244 = sadd.s32 %s243, 1
      %p247 = scmp.eq.s32.totalorder %s20, 1
      %p248 = scmp.ne.s32.totalorder %s243, %s245
      %p249 = scmp.eq.s32.totalorder %s20, 0
      %p250 = por %p248, %p249
      %p251 = scmp.ne.s32.totalorder %s243, %s245
      %p252 = scmp.eq.s32.totalorder %s25, 1
      %p253 = por %p251, %p252
      %p254 = scmp.ne.s32.totalorder %s245, %s246
      %p255 = scmp.eq.s32.totalorder %s25, 0
      %p256 = por %p254, %p255
      %p257 = scmp.ne.s32.totalorder %s245, %s246
      %p258 = scmp.eq.s32.totalorder %s26, 1
      %p259 = por %p257, %p258
      %p261 = scmp.ne.s32.totalorder %s246, %s260
      %p262 = scmp.eq.s32.totalorder %s26, 0
      %p263 = por %p261, %p262
      %s264 = ssub.s32 %s20, %s27
      %p265 = scmp.eq.s32.totalorder %s264, 0
      %s267 = sadd.s32 %s266, 1
      %s268 = scalar_select %p265, %s266, %s267
      %p271 = pneg %p265
      %p272 = scmp.eq.s32.totalorder %s20, 1
      %p273 = por %p271, %p272
      %p274 = scmp.ne.s32.totalorder %s266, %s269
      %p275 = scmp.eq.s32.totalorder %s20, 0
      %p276 = por %p274, %p275
      %p277 = scmp.ne.s32.totalorder %s266, %s269
      %p278 = scmp.eq.s32.totalorder %s25, 1
      %p279 = por %p277, %p278
      %p280 = scmp.ne.s32.totalorder %s269, %s270
      %p281 = scmp.eq.s32.totalorder %s25, 0
      %p282 = por %p280, %p281
      %p283 = scmp.ne.s32.totalorder %s269, %s270
      %p284 = scmp.eq.s32.totalorder %s26, 1
      %p285 = por %p283, %p284
      %p287 = scmp.ne.s32.totalorder %s270, %s286
      %p288 = scmp.eq.s32.totalorder %s26, 0
      %p289 = por %p287, %p288
      %p290 = scmp.le.s32.totalorder 1, %s20
      %p291 = scmp.lt.s32.totalorder %s20, 3
      %p292 = pnand %p290, %p291
      %p293 = pneg %p292
      // Predicated region
      $region9: #{_lambda_.1} parent=5 // pred_check
        _
      $region10: #{_lambda_.1} parent=5 // pred_check_branch
        %295 = sbr.rel (%p292) target = $region12
      $region11: #{_lambda_.1} parent=5 // pred_region
        %s296 = ssub.s32 %s20, 1
        // Predicated region
        $region13: #{_lambda_.1} parent=11 // pred_check
          %p297 = pneg %p67
        $region14: #{_lambda_.1} parent=11 // pred_check_branch
          %299 = sbr.rel (%p297) target = $region16
        $region15: #{_lambda_.1} parent=11 // pred_region
          %s301 = ssub.s32 6144, 6144
          %302 = vsyncadd [#allocation3], %s301
          %s303 = sshll.u32 [#allocation2], 4
          %s304 = int_to_ptr.vmem [resolvable:$true] %s303
          %309 = dma.hbm_to_vmem [thread:$0]  %s1, 6144, %s304, [#allocation3], 128, 128, 8
        $region16: #{_lambda_.1} parent=11 // pred_fallthru
          _
        // Predicated region
        $region17: #{_lambda_.1} parent=11 // pred_check
          %p310 = pneg %p88
        $region18: #{_lambda_.1} parent=11 // pred_check_branch
          %312 = sbr.rel (%p310) target = $region20
        $region19: #{_lambda_.1} parent=11 // pred_region
          _
        $region20: #{_lambda_.1} parent=11 // pred_fallthru
          _
        // Predicated region
        $region21: #{_lambda_.1} parent=11 // pred_check
          %p313 = pneg %p109
        $region22: #{_lambda_.1} parent=11 // pred_check_branch
          %315 = sbr.rel (%p313) target = $region24
        $region23: #{_lambda_.1} parent=11 // pred_region
          %s317 = ssub.s32 6144, 6144
          %318 = vsyncadd [#allocation5], %s317
          %s319 = sshll.u32 [#allocation4], 4
          %s320 = int_to_ptr.vmem [resolvable:$true] %s319
          %325 = dma.hbm_to_vmem [thread:$0]  %s3, 6144, %s320, [#allocation5], 128, 128, 8
        $region24: #{_lambda_.1} parent=11 // pred_fallthru
          _
        // Predicated region
        $region25: #{_lambda_.1} parent=11 // pred_check
          %p326 = pneg %p130
        $region26: #{_lambda_.1} parent=11 // pred_check_branch
          %328 = sbr.rel (%p326) target = $region28
        $region27: #{_lambda_.1} parent=11 // pred_region
          _
        $region28: #{_lambda_.1} parent=11 // pred_fallthru
          _
        // Predicated region
        $region29: #{_lambda_.1} parent=11 // pred_check
          %p329 = pneg %p151
        $region30: #{_lambda_.1} parent=11 // pred_check_branch
          %331 = sbr.rel (%p329) target = $region32
        $region31: #{_lambda_.1} parent=11 // pred_region
          %s333 = ssub.s32 6144, 6144
          %334 = vsyncadd [#allocation5], %s333
          %s335 = sshll.u32 [#allocation6], 4
          %s336 = int_to_ptr.vmem [resolvable:$true] %s335
          %341 = dma.hbm_to_vmem [thread:$0]  %s5, 6144, %s336, [#allocation5], 128, 128, 8
        $region32: #{_lambda_.1} parent=11 // pred_fallthru
          _
        // Predicated region
        $region33: #{_lambda_.1} parent=11 // pred_check
          %p342 = pneg %p172
        $region34: #{_lambda_.1} parent=11 // pred_check_branch
          %344 = sbr.rel (%p342) target = $region36
        $region35: #{_lambda_.1} parent=11 // pred_region
          _
        $region36: #{_lambda_.1} parent=11 // pred_fallthru
          _
        // Predicated region
        $region37: #{_lambda_.1} parent=11 // pred_check
          %p345 = pneg %p193
        $region38: #{_lambda_.1} parent=11 // pred_check_branch
          %347 = sbr.rel (%p345) target = $region40
        $region39: #{_lambda_.1} parent=11 // pred_region
          %s349 = ssub.s32 6144, 6144
          %350 = vsyncadd [#allocation8], %s349
          %s351 = sshll.u32 [#allocation7], 4
          %s352 = int_to_ptr.vmem [resolvable:$true] %s351
          %357 = dma.hbm_to_vmem [thread:$0]  %s7, 6144, %s352, [#allocation8], 128, 128, 8
        $region40: #{_lambda_.1} parent=11 // pred_fallthru
          _
        // Predicated region
        $region41: #{_lambda_.1} parent=11 // pred_check
          %p358 = pneg %p214
        $region42: #{_lambda_.1} parent=11 // pred_check_branch
          %360 = sbr.rel (%p358) target = $region44
        $region43: #{_lambda_.1} parent=11 // pred_region
          _
        $region44: #{_lambda_.1} parent=11 // pred_fallthru
          _
        // Predicated region
        $region45: #{_lambda_.1} parent=11 // pred_check
          %p361 = pneg %p235
        $region46: #{_lambda_.1} parent=11 // pred_check_branch
          %363 = sbr.rel (%p361) target = $region48
        $region47: #{_lambda_.1} parent=11 // pred_region
          _
        $region48: #{_lambda_.1} parent=11 // pred_fallthru
          _
        // Predicated region
        $region49: #{_lambda_.1} parent=11 // pred_check
          %p364 = pneg %p256
        $region50: #{_lambda_.1} parent=11 // pred_check_branch
          %366 = sbr.rel (%p364) target = $region52
        $region51: #{_lambda_.1} parent=11 // pred_region
          _
        $region52: #{_lambda_.1} parent=11 // pred_fallthru
          _
      $region12: #{_lambda_.1} parent=5 // pred_fallthru
        _
      %p367 = scmp.lt.s32.totalorder %s20, 2
      // Predicated region
      $region53: #{_lambda_.1} parent=5 // pred_check
        %p368 = pneg %p367
      $region54: #{_lambda_.1} parent=5 // pred_check_branch
        %370 = sbr.rel (%p368) target = $region56
      $region55: #{_lambda_.1} parent=5 // pred_region
        // Predicated region
        $region57: #{_lambda_.1} parent=55 // pred_check
          %p371 = pneg %p40
        $region58: #{_lambda_.1} parent=55 // pred_check_branch
          %373 = sbr.rel (%p371) target = $region60
        $region59: #{_lambda_.1} parent=55 // pred_region
          %s374 = smul.u32 4, %s20
          %p375 = scmp.lt.s32.totalorder %s374, 7
          %s376 = scalar_select %p375, %s374, 7
          %s377 = smul.addr %s376, 8
          %s378 = scalar_lea.vmem %s0, %s377
          %s379 = smul.u32 4, %s20
        $region60: #{_lambda_.1} parent=55 // pred_fallthru
          _
      $region56: #{_lambda_.1} parent=5 // pred_fallthru
        _
      %p380 = scmp.le.s32.totalorder 1, %s20
      %p381 = scmp.lt.s32.totalorder %s20, 3
      %p382 = pnand %p380, %p381
      %p383 = pneg %p382
      // Predicated region
      $region61: #{_lambda_.1} parent=5 // pred_check
        _
      $region62: #{_lambda_.1} parent=5 // pred_check_branch
        %385 = sbr.rel (%p382) target = $region64
      $region63: #{_lambda_.1} parent=5 // pred_region
        %s386 = ssub.s32 %s20, 1
        // Predicated region
        $region65: #{_lambda_.1} parent=63 // pred_check
          %p387 = pneg %p67
        $region66: #{_lambda_.1} parent=63 // pred_check_branch
          %389 = sbr.rel (%p387) target = $region68
        $region67: #{_lambda_.1} parent=63 // pred_region
          %390 = dma.done [#allocation3], 6144
        $region68: #{_lambda_.1} parent=63 // pred_fallthru
          _
        // Predicated region
        $region69: #{_lambda_.1} parent=63 // pred_check
          %p391 = pneg %p109
        $region70: #{_lambda_.1} parent=63 // pred_check_branch
          %393 = sbr.rel (%p391) target = $region72
        $region71: #{_lambda_.1} parent=63 // pred_region
          %394 = dma.done [#allocation5], 6144
        $region72: #{_lambda_.1} parent=63 // pred_fallthru
          _
        // Predicated region
        $region73: #{_lambda_.1} parent=63 // pred_check
          %p395 = pneg %p151
        $region74: #{_lambda_.1} parent=63 // pred_check_branch
          %397 = sbr.rel (%p395) target = $region76
        $region75: #{_lambda_.1} parent=63 // pred_region
          %398 = dma.done [#allocation5], 6144
        $region76: #{_lambda_.1} parent=63 // pred_fallthru
          _
        // Predicated region
        $region77: #{_lambda_.1} parent=63 // pred_check
          %p399 = pneg %p193
        $region78: #{_lambda_.1} parent=63 // pred_check_branch
          %401 = sbr.rel (%p399) target = $region80
        $region79: #{_lambda_.1} parent=63 // pred_region
          %402 = dma.done [#allocation8], 6144
        $region80: #{_lambda_.1} parent=63 // pred_fallthru
          _
        %s403 = smul.u32 4, %s25
        %p404 = scmp.lt.s32.totalorder %s403, 7
        %s405 = scalar_select %p404, %s403, 7
        %s406 = smul.addr %s405, 8
        %s407 = scalar_lea.vmem %s0, %s406
        %p408 = pneg %p46
        %p409 = pneg %p43
        %p410 = pneg %p67
        %p411 = pneg %p64
        %p412 = pneg %p88
        %p413 = pneg %p85
        %p414 = pneg %p109
        %p415 = pneg %p106
        %p416 = pneg %p130
        %p417 = pneg %p127
        %p418 = pneg %p151
        %p419 = pneg %p148
        %p420 = pneg %p172
        %p421 = pneg %p169
        %p422 = pneg %p193
        %p423 = pneg %p190
        %p424 = pneg %p214
        %p425 = pneg %p211
        %p426 = pneg %p235
        %p427 = pneg %p232
        %p428 = pneg %p256
        %p429 = pneg %p253
        %p430 = pneg %p282
        %p431 = pneg %p279
        %s432 = smul.u32 4, %s25
        %p433 = scmp.lt.s32.totalorder %s432, 7
        %s434 = scalar_select %p433, %s432, 7
        %s435 = smul.addr %s434, 8
        %s436 = scalar_lea.vmem %s11, %s435
        %s437 = smul.u32 4, %s25
        %p438 = scmp.lt.s32.totalorder %s437, 7
        %s439 = scalar_select %p438, %s437, 7
        %s440 = smul.addr %s439, 8
        %s441 = scalar_lea.vmem %s0, %s440
        %s442 = smul.u32 4, %s25
        %s443 = smul.u32 4, %s25
        %p444 = scmp.lt.s32.totalorder %s443, 7
        %s445 = scalar_select %p444, %s443, 7
        %s446 = smul.addr %s445, 8
        %s447 = scalar_lea.vmem %s11, %s446
        %s448 = smul.u32 4, %s25
        %v449 = vlaneseq
        %v450 = vshrl.u32 %v449, 7
        %v451 = vadd.s32 %v450, 8
        %v452 = vadd.s32 %v450, 16
        %v453 = vadd.s32 %v450, 24
        %vm454 = vcmp.ge.s32.totalorder %v450, 16
        %vm455 = vcmp.ge.s32.totalorder %v451, 16
        %vm456 = vcmp.ge.s32.totalorder %v452, 16
        %vm457 = vcmp.ge.s32.totalorder %v453, 16
        %v458 = vsub.s32 %v450, 16
        %v459 = vsub.s32 %v451, 16
        %v460 = vsub.s32 %v453, 16
        %v461 = vsel %vm454, %v458, %v450
        %v462 = vsel %vm455, %v459, %v451
        %v463 = vsel %vm456, %v450, %v452
        %v464 = vsel %vm457, %v460, %v453
        %v465 = vld [vmem:[%s441] sm:$0xff]
        %v466 = vld [vmem:[%s441 + $0x8] sm:$0xff]
        %v467 = vld [vmem:[%s441 + $0x10] sm:$0xff]
        %v468 = vld [vmem:[%s441 + $0x18] sm:$0xff]
        %vm469 = vcmp.ge.s32.totalorder %v461, 2
        %vm470 = vcmp.ge.s32.totalorder %v462, 2
        %vm471 = vcmp.ge.s32.totalorder %v463, 2
        %vm472 = vcmp.ge.s32.totalorder %v464, 2
        %v473 = vsel %vm469, 1, 0
        %v474 = vsel %vm470, 1, 0
        %v475 = vsel %vm471, 1, 0
        %v476 = vsel %vm472, 1, 0
        %v477 = vcvt.s32.f32 %v473
        %v478 = vcvt.s32.f32 %v474
        %v479 = vcvt.s32.f32 %v475
        %v480 = vcvt.s32.f32 %v476
        %vm481 = vcmp.ge.s32.totalorder %v461, 1
        %vm482 = vcmp.ge.s32.totalorder %v462, 1
        %vm483 = vcmp.ge.s32.totalorder %v463, 1
        %vm484 = vcmp.ge.s32.totalorder %v464, 1
        %v485 = vsel %vm481, 1, 0
        %v486 = vsel %vm482, 1, 0
        %v487 = vsel %vm483, 1, 0
        %v488 = vsel %vm484, 1, 0
        %v489 = vcvt.s32.f32 %v485
        %v490 = vcvt.s32.f32 %v486
        %v491 = vcvt.s32.f32 %v487
        %v492 = vcvt.s32.f32 %v488
        %v493 = vrot.slane %v465, 6
        %v494 = vrot.slane %v466, 6
        %v495 = vrot.slane %v467, 6
        %v496 = vrot.slane %v468, 6
        %vm497 = vcmp.lt.s32.totalorder %v450, 2
        %v498 = vsel %vm497, %v495, %v496
        %v499 = vsel %vm497, %v494, %v495
        %v500 = vsel %vm497, %v493, %v494
        %v501 = vsel %vm497, %v496, %v493
        %v502 = vmul.f32 %v501, %v477
        %v503 = vmul.f32 %v500, %v478
        %v504 = vmul.f32 %v499, %v479
        %v505 = vmul.f32 %v498, %v480
        %v506 = vrot.slane %v465, 7
        %v507 = vrot.slane %v466, 7
        %v508 = vrot.slane %v467, 7
        %v509 = vrot.slane %v468, 7
        %vm510 = vcmp.lt.s32.totalorder %v450, 1
        %v511 = vsel %vm510, %v508, %v509
        %v512 = vsel %vm510, %v507, %v508
        %v513 = vsel %vm510, %v506, %v507
        %v514 = vsel %vm510, %v509, %v506
        %v515 = vmul.f32 %v514, %v489
        %v516 = vmul.f32 %v513, %v490
        %v517 = vmul.f32 %v512, %v491
        %v518 = vmul.f32 %v511, %v492
        %v519 = vld [vmem:[#allocation2] sm:$0xff]
        %v520 = vld [vmem:[#allocation2 + $0x8] sm:$0xff]
        %v521 = vld [vmem:[#allocation2 + $0x10] sm:$0xff]
        %v522 = vld [vmem:[#allocation2 + $0x18] sm:$0xff]
        %v523 = vld [vmem:[#allocation2 + $0x20] sm:$0xff]
        %v524 = vld [vmem:[#allocation2 + $0x28] sm:$0xff]
        %v525 = vld [vmem:[#allocation2 + $0x30] sm:$0xff]
        %v526 = vld [vmem:[#allocation2 + $0x38] sm:$0xff]
        %v527 = vld [vmem:[#allocation2 + $0x40] sm:$0xff]
        %v528 = vld [vmem:[#allocation2 + $0x48] sm:$0xff]
        %v529 = vld [vmem:[#allocation2 + $0x50] sm:$0xff]
        %v530 = vld [vmem:[#allocation2 + $0x58] sm:$0xff]
        %v531 = vld [vmem:[#allocation2 + $0x60] sm:$0xff]
        %v532 = vld [vmem:[#allocation2 + $0x68] sm:$0xff]
        %v533 = vld [vmem:[#allocation2 + $0x70] sm:$0xff]
        %v534 = vld [vmem:[#allocation2 + $0x78] sm:$0xff]
        %v535 = vld [vmem:[#allocation2 + $0x80] sm:$0xff]
        %v536 = vld [vmem:[#allocation2 + $0x88] sm:$0xff]
        %v537 = vld [vmem:[#allocation2 + $0x90] sm:$0xff]
        %v538 = vld [vmem:[#allocation2 + $0x98] sm:$0xff]
        %v539 = vld [vmem:[#allocation2 + $0xa0] sm:$0xff]
        %v540 = vld [vmem:[#allocation2 + $0xa8] sm:$0xff]
        %v541 = vld [vmem:[#allocation2 + $0xb0] sm:$0xff]
        %v542 = vld [vmem:[#allocation2 + $0xb8] sm:$0xff]
        %v543 = vld [vmem:[#allocation2 + $0xc0] sm:$0xff]
        %v544 = vld [vmem:[#allocation2 + $0xc8] sm:$0xff]
        %v545 = vld [vmem:[#allocation2 + $0xd0] sm:$0xff]
        %v546 = vld [vmem:[#allocation2 + $0xd8] sm:$0xff]
        %v547 = vld [vmem:[#allocation2 + $0xe0] sm:$0xff]
        %v548 = vld [vmem:[#allocation2 + $0xe8] sm:$0xff]
        %v549 = vld [vmem:[#allocation2 + $0xf0] sm:$0xff]
        %v550 = vld [vmem:[#allocation2 + $0xf8] sm:$0xff]
        %v551 = vld [vmem:[#allocation2 + $0x100] sm:$0xff]
        %v552 = vld [vmem:[#allocation2 + $0x108] sm:$0xff]
        %v553 = vld [vmem:[#allocation2 + $0x110] sm:$0xff]
        %v554 = vld [vmem:[#allocation2 + $0x118] sm:$0xff]
        %v555 = vld [vmem:[#allocation2 + $0x120] sm:$0xff]
        %v556 = vld [vmem:[#allocation2 + $0x128] sm:$0xff]
        %v557 = vld [vmem:[#allocation2 + $0x130] sm:$0xff]
        %v558 = vld [vmem:[#allocation2 + $0x138] sm:$0xff]
        %v559 = vld [vmem:[#allocation2 + $0x140] sm:$0xff]
        %v560 = vld [vmem:[#allocation2 + $0x148] sm:$0xff]
        %v561 = vld [vmem:[#allocation2 + $0x150] sm:$0xff]
        %v562 = vld [vmem:[#allocation2 + $0x158] sm:$0xff]
        %v563 = vld [vmem:[#allocation2 + $0x160] sm:$0xff]
        %v564 = vld [vmem:[#allocation2 + $0x168] sm:$0xff]
        %v565 = vld [vmem:[#allocation2 + $0x170] sm:$0xff]
        %v566 = vld [vmem:[#allocation2 + $0x178] sm:$0xff]
        %v567 = vld [vmem:[%s2] sm:$0x1]
        %v569 = vlaneseq
        %v570 = vshrl.u32 %v569, 7
        %v571 = vsub.s32 0, %v570
        %v572 = vrot.slane %v567, %v571
        %574 = vmatprep.subr.mxu0 0.0
        %575 = vmatpush1.msra.mxu0 %v519
        %576 = vmatprep.subr.mxu0 0.0
        %577 = vmatpush1.msra.mxu0 %v520
        %578 = vmatprep.subr.mxu0 0.0
        %579 = vmatpush1.msra.mxu0 %v521
        %580 = vmatprep.subr.mxu0 0.0
        %581 = vmatpush1.msra.mxu0 %v522
        %582 = vmatprep.subr.mxu0 0.0
        %583 = vmatpush1.msra.mxu0 %v523
        %584 = vmatprep.subr.mxu0 0.0
        %585 = vmatpush1.msra.mxu0 %v524
        %586 = vmatprep.subr.mxu0 0.0
        %587 = vmatpush1.msra.mxu0 %v525
        %588 = vmatprep.subr.mxu0 0.0
        %589 = vmatpush1.msra.mxu0 %v526
        %590 = vmatprep.subr.mxu0 0.0
        %591 = vmatpush1.msra.mxu0 %v527
        %592 = vmatprep.subr.mxu0 0.0
        %593 = vmatpush1.msra.mxu0 %v528
        %594 = vmatprep.subr.mxu0 0.0
        %595 = vmatpush1.msra.mxu0 %v529
        %596 = vmatprep.subr.mxu0 0.0
        %597 = vmatpush1.msra.mxu0 %v530
        %598 = vmatprep.subr.mxu0 0.0
        %599 = vmatpush1.msra.mxu0 %v531
        %600 = vmatprep.subr.mxu0 0.0
        %601 = vmatpush1.msra.mxu0 %v532
        %602 = vmatprep.subr.mxu0 0.0
        %603 = vmatpush1.msra.mxu0 %v533
        %604 = vmatprep.subr.mxu0 0.0
        %605 = vmatpush1.msra.mxu0 %v534
        %606 = vmatprep.subr.mxu0 0.0
        %607 = vmatpush1.msra.mxu0 %v535
        %608 = vmatprep.subr.mxu0 0.0
        %609 = vmatpush1.msra.mxu0 %v536
        %610 = vmatprep.subr.mxu0 0.0
        %611 = vmatpush1.msra.mxu0 %v537
        %612 = vmatprep.subr.mxu0 0.0
        %613 = vmatpush1.msra.mxu0 %v538
        %614 = vmatprep.subr.mxu0 0.0
        %615 = vmatpush1.msra.mxu0 %v539
        %616 = vmatprep.subr.mxu0 0.0
        %617 = vmatpush1.msra.mxu0 %v540
        %618 = vmatprep.subr.mxu0 0.0
        %619 = vmatpush1.msra.mxu0 %v541
        %620 = vmatprep.subr.mxu0 0.0
        %621 = vmatpush1.msra.mxu0 %v542
        %622 = vmatprep.subr.mxu0 0.0
        %623 = vmatpush1.msra.mxu0 %v543
        %624 = vmatprep.subr.mxu0 0.0
        %625 = vmatpush1.msra.mxu0 %v544
        %626 = vmatprep.subr.mxu0 0.0
        %627 = vmatpush1.msra.mxu0 %v545
        %628 = vmatprep.subr.mxu0 0.0
        %629 = vmatpush1.msra.mxu0 %v546
        %630 = vmatprep.subr.mxu0 0.0
        %631 = vmatpush1.msra.mxu0 %v547
        %632 = vmatprep.subr.mxu0 0.0
        %633 = vmatpush1.msra.mxu0 %v548
        %634 = vmatprep.subr.mxu0 0.0
        %635 = vmatpush1.msra.mxu0 %v549
        %636 = vmatprep.subr.mxu0 0.0
        %637 = vmatpush1.msra.mxu0 %v550
        %638 = vmatprep.mubr.f32.mxu0 %v515
        %639 = vmatmul.mubr.f32.gmra.mrb[0].mxu0 %v502
        %v640 = vpop.f32.mrb[0].mxu0
        %v641 = vadd.f32 %v572, %v640
        %v642 = vpop.f32.mrb[0].mxu0
        %643 = vmatprep.mubr.f32.mxu0 %v516
        %644 = vmatmul.mubr.f32.gmra.mrb[0].mxu0 %v503
        %v645 = vpop.f32.mrb[0].mxu0
        %v646 = vadd.f32 %v572, %v645
        %v647 = vpop.f32.mrb[0].mxu0
        %648 = vmatprep.mubr.f32.mxu0 %v517
        %649 = vmatmul.mubr.f32.gmra.mrb[0].mxu0 %v504
        %v650 = vpop.f32.mrb[0].mxu0
        %v651 = vadd.f32 %v572, %v650
        %v652 = vpop.f32.mrb[0].mxu0
        %653 = vmatprep.mubr.f32.mxu0 %v518
        %654 = vmatmul.mubr.f32.gmra.mrb[0].mxu0 %v505
        %v655 = vpop.f32.mrb[0].mxu0
        %v656 = vadd.f32 %v572, %v655
        %v657 = vpop.f32.mrb[0].mxu0
        %658 = vdwg.mxu0
        %659 = vmatprep.subr.mxu0 0.0
        %660 = vmatpush1.msra.mxu0 %v551
        %661 = vmatprep.subr.mxu0 0.0
        %662 = vmatpush1.msra.mxu0 %v552
        %663 = vmatprep.subr.mxu0 0.0
        %664 = vmatpush1.msra.mxu0 %v553
        %665 = vmatprep.subr.mxu0 0.0
        %666 = vmatpush1.msra.mxu0 %v554
        %667 = vmatprep.subr.mxu0 0.0
        %668 = vmatpush1.msra.mxu0 %v555
        %669 = vmatprep.subr.mxu0 0.0
        %670 = vmatpush1.msra.mxu0 %v556
        %671 = vmatprep.subr.mxu0 0.0
        %672 = vmatpush1.msra.mxu0 %v557
        %673 = vmatprep.subr.mxu0 0.0
        %674 = vmatpush1.msra.mxu0 %v558
        %675 = vmatprep.subr.mxu0 0.0
        %676 = vmatpush1.msra.mxu0 %v559
        %677 = vmatprep.subr.mxu0 0.0
        %678 = vmatpush1.msra.mxu0 %v560
        %679 = vmatprep.subr.mxu0 0.0
        %680 = vmatpush1.msra.mxu0 %v561
        %681 = vmatprep.subr.mxu0 0.0
        %682 = vmatpush1.msra.mxu0 %v562
        %683 = vmatprep.subr.mxu0 0.0
        %684 = vmatpush1.msra.mxu0 %v563
        %685 = vmatprep.subr.mxu0 0.0
        %686 = vmatpush1.msra.mxu0 %v564
        %687 = vmatprep.subr.mxu0 0.0
        %688 = vmatpush1.msra.mxu0 %v565
        %689 = vmatprep.subr.mxu0 0.0
        %690 = vmatpush1.msra.mxu0 %v566
        %691 = vmatprep.subr.mxu0 0.0
        %692 = vmatpush1.msra.mxu0 0.0
        %693 = vmatprep.subr.mxu0 0.0
        %694 = vmatpush1.msra.mxu0 0.0
        %695 = vmatprep.subr.mxu0 0.0
        %696 = vmatpush1.msra.mxu0 0.0
        %697 = vmatprep.subr.mxu0 0.0
        %698 = vmatpush1.msra.mxu0 0.0
        %699 = vmatprep.subr.mxu0 0.0
        %700 = vmatpush1.msra.mxu0 0.0
        %701 = vmatprep.subr.mxu0 0.0
        %702 = vmatpush1.msra.mxu0 0.0
        %703 = vmatprep.subr.mxu0 0.0
        %704 = vmatpush1.msra.mxu0 0.0
        %705 = vmatprep.subr.mxu0 0.0
        %706 = vmatpush1.msra.mxu0 0.0
        %707 = vmatprep.subr.mxu0 0.0
        %708 = vmatpush1.msra.mxu0 0.0
        %709 = vmatprep.subr.mxu0 0.0
        %710 = vmatpush1.msra.mxu0 0.0
        %711 = vmatprep.subr.mxu0 0.0
        %712 = vmatpush1.msra.mxu0 0.0
        %713 = vmatprep.subr.mxu0 0.0
        %714 = vmatpush1.msra.mxu0 0.0
        %715 = vmatprep.subr.mxu0 0.0
        %716 = vmatpush1.msra.mxu0 0.0
        %717 = vmatprep.subr.mxu0 0.0
        %718 = vmatpush1.msra.mxu0 0.0
        %719 = vmatprep.subr.mxu0 0.0
        %720 = vmatpush1.msra.mxu0 0.0
        %721 = vmatprep.subr.mxu0 0.0
        %722 = vmatpush1.msra.mxu0 0.0
        %723 = vmatprep.mubr.f32.mxu0 0.0
        %724 = vmatmul.mubr.f32.gmra.mrb[0].mxu0 %v465
        %v725 = vpop.f32.mrb[0].mxu0
        %v726 = vadd.f32 %v641, %v725
        %v727 = vpop.f32.mrb[0].mxu0
        %728 = vmatprep.mubr.f32.mxu0 0.0
        %729 = vmatmul.mubr.f32.gmra.mrb[0].mxu0 %v466
        %v730 = vpop.f32.mrb[0].mxu0
        %v731 = vadd.f32 %v646, %v730
        %v732 = vpop.f32.mrb[0].mxu0
        %733 = vmatprep.mubr.f32.mxu0 0.0
        %734 = vmatmul.mubr.f32.gmra.mrb[0].mxu0 %v467
        %v735 = vpop.f32.mrb[0].mxu0
        %v736 = vadd.f32 %v651, %v735
        %v737 = vpop.f32.mrb[0].mxu0
        %738 = vmatprep.mubr.f32.mxu0 0.0
        %739 = vmatmul.mubr.f32.gmra.mrb[0].mxu0 %v468
        %v740 = vpop.f32.mrb[0].mxu0
        %v741 = vadd.f32 %v656, %v740
        %v742 = vpop.f32.mrb[0].mxu0
        %743 = vdwg.mxu0
        %v744 = vmax.f32 %v726, 0.0
        %v745 = vmax.f32 %v731, 0.0
        %v746 = vmax.f32 %v736, 0.0
        %v747 = vmax.f32 %v741, 0.0
        %v748 = vrot.slane %v744, 6
        %v749 = vrot.slane %v745, 6
        %v750 = vrot.slane %v746, 6
        %v751 = vrot.slane %v747, 6
        %v752 = vsel %vm497, %v750, %v751
        %v753 = vsel %vm497, %v749, %v750
        %v754 = vsel %vm497, %v748, %v749
        %v755 = vsel %vm497, %v751, %v748
        %v756 = vmul.f32 %v755, %v477
        %v757 = vmul.f32 %v754, %v478
        %v758 = vmul.f32 %v753, %v479
        %v759 = vmul.f32 %v752, %v480
        %v760 = vrot.slane %v744, 7
        %v761 = vrot.slane %v745, 7
        %v762 = vrot.slane %v746, 7
        %v763 = vrot.slane %v747, 7
        %v764 = vsel %vm510, %v762, %v763
        %v765 = vsel %vm510, %v761, %v762
        %v766 = vsel %vm510, %v760, %v761
        %v767 = vsel %vm510, %v763, %v760
        %v768 = vmul.f32 %v767, %v489
        %v769 = vmul.f32 %v766, %v490
        %v770 = vmul.f32 %v765, %v491
        %v771 = vmul.f32 %v764, %v492
        %v772 = vld [vmem:[#allocation4] sm:$0xff]
        %v773 = vld [vmem:[#allocation4 + $0x8] sm:$0xff]
        %v774 = vld [vmem:[#allocation4 + $0x10] sm:$0xff]
        %v775 = vld [vmem:[#allocation4 + $0x18] sm:$0xff]
        %v776 = vld [vmem:[#allocation4 + $0x20] sm:$0xff]
        %v777 = vld [vmem:[#allocation4 + $0x28] sm:$0xff]
        %v778 = vld [vmem:[#allocation4 + $0x30] sm:$0xff]
        %v779 = vld [vmem:[#allocation4 + $0x38] sm:$0xff]
        %v780 = vld [vmem:[#allocation4 + $0x40] sm:$0xff]
        %v781 = vld [vmem:[#allocation4 + $0x48] sm:$0xff]
        %v782 = vld [vmem:[#allocation4 + $0x50] sm:$0xff]
        %v783 = vld [vmem:[#allocation4 + $0x58] sm:$0xff]
        %v784 = vld [vmem:[#allocation4 + $0x60] sm:$0xff]
        %v785 = vld [vmem:[#allocation4 + $0x68] sm:$0xff]
        %v786 = vld [vmem:[#allocation4 + $0x70] sm:$0xff]
        %v787 = vld [vmem:[#allocation4 + $0x78] sm:$0xff]
        %v788 = vld [vmem:[#allocation4 + $0x80] sm:$0xff]
        %v789 = vld [vmem:[#allocation4 + $0x88] sm:$0xff]
        %v790 = vld [vmem:[#allocation4 + $0x90] sm:$0xff]
        %v791 = vld [vmem:[#allocation4 + $0x98] sm:$0xff]
        %v792 = vld [vmem:[#allocation4 + $0xa0] sm:$0xff]
        %v793 = vld [vmem:[#allocation4 + $0xa8] sm:$0xff]
        %v794 = vld [vmem:[#allocation4 + $0xb0] sm:$0xff]
        %v795 = vld [vmem:[#allocation4 + $0xb8] sm:$0xff]
        %v796 = vld [vmem:[#allocation4 + $0xc0] sm:$0xff]
        %v797 = vld [vmem:[#allocation4 + $0xc8] sm:$0xff]
        %v798 = vld [vmem:[#allocation4 + $0xd0] sm:$0xff]
        %v799 = vld [vmem:[#allocation4 + $0xd8] sm:$0xff]
        %v800 = vld [vmem:[#allocation4 + $0xe0] sm:$0xff]
        %v801 = vld [vmem:[#allocation4 + $0xe8] sm:$0xff]
        %v802 = vld [vmem:[#allocation4 + $0xf0] sm:$0xff]
        %v803 = vld [vmem:[#allocation4 + $0xf8] sm:$0xff]
        %v804 = vld [vmem:[#allocation4 + $0x100] sm:$0xff]
        %v805 = vld [vmem:[#allocation4 + $0x108] sm:$0xff]
        %v806 = vld [vmem:[#allocation4 + $0x110] sm:$0xff]
        %v807 = vld [vmem:[#allocation4 + $0x118] sm:$0xff]
        %v808 = vld [vmem:[#allocation4 + $0x120] sm:$0xff]
        %v809 = vld [vmem:[#allocation4 + $0x128] sm:$0xff]
        %v810 = vld [vmem:[#allocation4 + $0x130] sm:$0xff]
        %v811 = vld [vmem:[#allocation4 + $0x138] sm:$0xff]
        %v812 = vld [vmem:[#allocation4 + $0x140] sm:$0xff]
        %v813 = vld [vmem:[#allocation4 + $0x148] sm:$0xff]
        %v814 = vld [vmem:[#allocation4 + $0x150] sm:$0xff]
        %v815 = vld [vmem:[#allocation4 + $0x158] sm:$0xff]
        %v816 = vld [vmem:[#allocation4 + $0x160] sm:$0xff]
        %v817 = vld [vmem:[#allocation4 + $0x168] sm:$0xff]
        %v818 = vld [vmem:[#allocation4 + $0x170] sm:$0xff]
        %v819 = vld [vmem:[#allocation4 + $0x178] sm:$0xff]
        %v820 = vld [vmem:[%s4] sm:$0x1]
        %v822 = vlaneseq
        %v823 = vshrl.u32 %v822, 7
        %v824 = vsub.s32 0, %v823
        %v825 = vrot.slane %v820, %v824
        %827 = vmatprep.subr.mxu0 0.0
        %828 = vmatpush1.msra.mxu0 %v772
        %829 = vmatprep.subr.mxu0 0.0
        %830 = vmatpush1.msra.mxu0 %v773
        %831 = vmatprep.subr.mxu0 0.0
        %832 = vmatpush1.msra.mxu0 %v774
        %833 = vmatprep.subr.mxu0 0.0
        %834 = vmatpush1.msra.mxu0 %v775
        %835 = vmatprep.subr.mxu0 0.0
        %836 = vmatpush1.msra.mxu0 %v776
        %837 = vmatprep.subr.mxu0 0.0
        %838 = vmatpush1.msra.mxu0 %v777
        %839 = vmatprep.subr.mxu0 0.0
        %840 = vmatpush1.msra.mxu0 %v778
        %841 = vmatprep.subr.mxu0 0.0
        %842 = vmatpush1.msra.mxu0 %v779
        %843 = vmatprep.subr.mxu0 0.0
        %844 = vmatpush1.msra.mxu0 %v780
        %845 = vmatprep.subr.mxu0 0.0
        %846 = vmatpush1.msra.mxu0 %v781
        %847 = vmatprep.subr.mxu0 0.0
        %848 = vmatpush1.msra.mxu0 %v782
        %849 = vmatprep.subr.mxu0 0.0
        %850 = vmatpush1.msra.mxu0 %v783
        %851 = vmatprep.subr.mxu0 0.0
        %852 = vmatpush1.msra.mxu0 %v784
        %853 = vmatprep.subr.mxu0 0.0
        %854 = vmatpush1.msra.mxu0 %v785
        %855 = vmatprep.subr.mxu0 0.0
        %856 = vmatpush1.msra.mxu0 %v786
        %857 = vmatprep.subr.mxu0 0.0
        %858 = vmatpush1.msra.mxu0 %v787
        %859 = vmatprep.subr.mxu0 0.0
        %860 = vmatpush1.msra.mxu0 %v788
        %861 = vmatprep.subr.mxu0 0.0
        %862 = vmatpush1.msra.mxu0 %v789
        %863 = vmatprep.subr.mxu0 0.0
        %864 = vmatpush1.msra.mxu0 %v790
        %865 = vmatprep.subr.mxu0 0.0
        %866 = vmatpush1.msra.mxu0 %v791
        %867 = vmatprep.subr.mxu0 0.0
        %868 = vmatpush1.msra.mxu0 %v792
        %869 = vmatprep.subr.mxu0 0.0
        %870 = vmatpush1.msra.mxu0 %v793
        %871 = vmatprep.subr.mxu0 0.0
        %872 = vmatpush1.msra.mxu0 %v794
        %873 = vmatprep.subr.mxu0 0.0
        %874 = vmatpush1.msra.mxu0 %v795
        %875 = vmatprep.subr.mxu0 0.0
        %876 = vmatpush1.msra.mxu0 %v796
        %877 = vmatprep.subr.mxu0 0.0
        %878 = vmatpush1.msra.mxu0 %v797
        %879 = vmatprep.subr.mxu0 0.0
        %880 = vmatpush1.msra.mxu0 %v798
        %881 = vmatprep.subr.mxu0 0.0
        %882 = vmatpush1.msra.mxu0 %v799
        %883 = vmatprep.subr.mxu0 0.0
        %884 = vmatpush1.msra.mxu0 %v800
        %885 = vmatprep.subr.mxu0 0.0
        %886 = vmatpush1.msra.mxu0 %v801
        %887 = vmatprep.subr.mxu0 0.0
        %888 = vmatpush1.msra.mxu0 %v802
        %889 = vmatprep.subr.mxu0 0.0
        %890 = vmatpush1.msra.mxu0 %v803
        %891 = vmatprep.mubr.f32.mxu0 %v768
        %892 = vmatmul.mubr.f32.gmra.mrb[0].mxu0 %v756
        %v893 = vpop.f32.mrb[0].mxu0
        %v894 = vadd.f32 %v825, %v893
        %v895 = vpop.f32.mrb[0].mxu0
        %896 = vmatprep.mubr.f32.mxu0 %v769
        %897 = vmatmul.mubr.f32.gmra.mrb[0].mxu0 %v757
        %v898 = vpop.f32.mrb[0].mxu0
        %v899 = vadd.f32 %v825, %v898
        %v900 = vpop.f32.mrb[0].mxu0
        %901 = vmatprep.mubr.f32.mxu0 %v770
        %902 = vmatmul.mubr.f32.gmra.mrb[0].mxu0 %v758
        %v903 = vpop.f32.mrb[0].mxu0
        %v904 = vadd.f32 %v825, %v903
        %v905 = vpop.f32.mrb[0].mxu0
        %906 = vmatprep.mubr.f32.mxu0 %v771
        %907 = vmatmul.mubr.f32.gmra.mrb[0].mxu0 %v759
        %v908 = vpop.f32.mrb[0].mxu0
        %v909 = vadd.f32 %v825, %v908
        %v910 = vpop.f32.mrb[0].mxu0
        %911 = vdwg.mxu0
        %912 = vmatprep.subr.mxu0 0.0
        %913 = vmatpush1.msra.mxu0 %v804
        %914 = vmatprep.subr.mxu0 0.0
        %915 = vmatpush1.msra.mxu0 %v805
        %916 = vmatprep.subr.mxu0 0.0
        %917 = vmatpush1.msra.mxu0 %v806
        %918 = vmatprep.subr.mxu0 0.0
        %919 = vmatpush1.msra.mxu0 %v807
        %920 = vmatprep.subr.mxu0 0.0
        %921 = vmatpush1.msra.mxu0 %v808
        %922 = vmatprep.subr.mxu0 0.0
        %923 = vmatpush1.msra.mxu0 %v809
        %924 = vmatprep.subr.mxu0 0.0
        %925 = vmatpush1.msra.mxu0 %v810
        %926 = vmatprep.subr.mxu0 0.0
        %927 = vmatpush1.msra.mxu0 %v811
        %928 = vmatprep.subr.mxu0 0.0
        %929 = vmatpush1.msra.mxu0 %v812
        %930 = vmatprep.subr.mxu0 0.0
        %931 = vmatpush1.msra.mxu0 %v813
        %932 = vmatprep.subr.mxu0 0.0
        %933 = vmatpush1.msra.mxu0 %v814
        %934 = vmatprep.subr.mxu0 0.0
        %935 = vmatpush1.msra.mxu0 %v815
        %936 = vmatprep.subr.mxu0 0.0
        %937 = vmatpush1.msra.mxu0 %v816
        %938 = vmatprep.subr.mxu0 0.0
        %939 = vmatpush1.msra.mxu0 %v817
        %940 = vmatprep.subr.mxu0 0.0
        %941 = vmatpush1.msra.mxu0 %v818
        %942 = vmatprep.subr.mxu0 0.0
        %943 = vmatpush1.msra.mxu0 %v819
        %944 = vmatprep.subr.mxu0 0.0
        %945 = vmatpush1.msra.mxu0 0.0
        %946 = vmatprep.subr.mxu0 0.0
        %947 = vmatpush1.msra.mxu0 0.0
        %948 = vmatprep.subr.mxu0 0.0
        %949 = vmatpush1.msra.mxu0 0.0
        %950 = vmatprep.subr.mxu0 0.0
        %951 = vmatpush1.msra.mxu0 0.0
        %952 = vmatprep.subr.mxu0 0.0
        %953 = vmatpush1.msra.mxu0 0.0
        %954 = vmatprep.subr.mxu0 0.0
        %955 = vmatpush1.msra.mxu0 0.0
        %956 = vmatprep.subr.mxu0 0.0
        %957 = vmatpush1.msra.mxu0 0.0
        %958 = vmatprep.subr.mxu0 0.0
        %959 = vmatpush1.msra.mxu0 0.0
        %960 = vmatprep.subr.mxu0 0.0
        %961 = vmatpush1.msra.mxu0 0.0
        %962 = vmatprep.subr.mxu0 0.0
        %963 = vmatpush1.msra.mxu0 0.0
        %964 = vmatprep.subr.mxu0 0.0
        %965 = vmatpush1.msra.mxu0 0.0
        %966 = vmatprep.subr.mxu0 0.0
        %967 = vmatpush1.msra.mxu0 0.0
        %968 = vmatprep.subr.mxu0 0.0
        %969 = vmatpush1.msra.mxu0 0.0
        %970 = vmatprep.subr.mxu0 0.0
        %971 = vmatpush1.msra.mxu0 0.0
        %972 = vmatprep.subr.mxu0 0.0
        %973 = vmatpush1.msra.mxu0 0.0
        %974 = vmatprep.subr.mxu0 0.0
        %975 = vmatpush1.msra.mxu0 0.0
        %976 = vmatprep.mubr.f32.mxu0 0.0
        %977 = vmatmul.mubr.f32.gmra.mrb[0].mxu0 %v744
        %v978 = vpop.f32.mrb[0].mxu0
        %v979 = vadd.f32 %v894, %v978
        %v980 = vpop.f32.mrb[0].mxu0
        %981 = vmatprep.mubr.f32.mxu0 0.0
        %982 = vmatmul.mubr.f32.gmra.mrb[0].mxu0 %v745
        %v983 = vpop.f32.mrb[0].mxu0
        %v984 = vadd.f32 %v899, %v983
        %v985 = vpop.f32.mrb[0].mxu0
        %986 = vmatprep.mubr.f32.mxu0 0.0
        %987 = vmatmul.mubr.f32.gmra.mrb[0].mxu0 %v746
        %v988 = vpop.f32.mrb[0].mxu0
        %v989 = vadd.f32 %v904, %v988
        %v990 = vpop.f32.mrb[0].mxu0
        %991 = vmatprep.mubr.f32.mxu0 0.0
        %992 = vmatmul.mubr.f32.gmra.mrb[0].mxu0 %v747
        %v993 = vpop.f32.mrb[0].mxu0
        %v994 = vadd.f32 %v909, %v993
        %v995 = vpop.f32.mrb[0].mxu0
        %996 = vdwg.mxu0
        %v997 = vadd.f32 %v979, %v465
        %v998 = vadd.f32 %v984, %v466
        %v999 = vadd.f32 %v989, %v467
        %v1000 = vadd.f32 %v994, %v468
        %v1001 = vmax.f32 %v997, 0.0
        %v1002 = vmax.f32 %v998, 0.0
        %v1003 = vmax.f32 %v999, 0.0
        %v1004 = vmax.f32 %v1000, 0.0
        %vm1005 = vcmp.ge.s32.totalorder %v461, 4
        %vm1006 = vcmp.ge.s32.totalorder %v462, 4
        %vm1007 = vcmp.ge.s32.totalorder %v463, 4
        %vm1008 = vcmp.ge.s32.totalorder %v464, 4
        %v1009 = vsel %vm1005, 1, 0
        %v1010 = vsel %vm1006, 1, 0
        %v1011 = vsel %vm1007, 1, 0
        %v1012 = vsel %vm1008, 1, 0
        %v1013 = vcvt.s32.f32 %v1009
        %v1014 = vcvt.s32.f32 %v1010
        %v1015 = vcvt.s32.f32 %v1011
        %v1016 = vcvt.s32.f32 %v1012
        %v1017 = vrot.slane %v1001, 4
        %v1018 = vrot.slane %v1002, 4
        %v1019 = vrot.slane %v1003, 4
        %v1020 = vrot.slane %v1004, 4
        %vm1021 = vcmp.lt.s32.totalorder %v450, 4
        %v1022 = vsel %vm1021, %v1019, %v1020
        %v1023 = vsel %vm1021, %v1018, %v1019
        %v1024 = vsel %vm1021, %v1017, %v1018
        %v1025 = vsel %vm1021, %v1020, %v1017
        %v1026 = vmul.f32 %v1025, %v1013
        %v1027 = vmul.f32 %v1024, %v1014
        %v1028 = vmul.f32 %v1023, %v1015
        %v1029 = vmul.f32 %v1022, %v1016
        %v1030 = vrot.slane %v1001, 6
        %v1031 = vrot.slane %v1002, 6
        %v1032 = vrot.slane %v1003, 6
        %v1033 = vrot.slane %v1004, 6
        %v1034 = vsel %vm497, %v1032, %v1033
        %v1035 = vsel %vm497, %v1031, %v1032
        %v1036 = vsel %vm497, %v1030, %v1031
        %v1037 = vsel %vm497, %v1033, %v1030
        %v1038 = vmul.f32 %v1037, %v477
        %v1039 = vmul.f32 %v1036, %v478
        %v1040 = vmul.f32 %v1035, %v479
        %v1041 = vmul.f32 %v1034, %v480
        %v1042 = vld [vmem:[#allocation6] sm:$0xff]
        %v1043 = vld [vmem:[#allocation6 + $0x8] sm:$0xff]
        %v1044 = vld [vmem:[#allocation6 + $0x10] sm:$0xff]
        %v1045 = vld [vmem:[#allocation6 + $0x18] sm:$0xff]
        %v1046 = vld [vmem:[#allocation6 + $0x20] sm:$0xff]
        %v1047 = vld [vmem:[#allocation6 + $0x28] sm:$0xff]
        %v1048 = vld [vmem:[#allocation6 + $0x30] sm:$0xff]
        %v1049 = vld [vmem:[#allocation6 + $0x38] sm:$0xff]
        %v1050 = vld [vmem:[#allocation6 + $0x40] sm:$0xff]
        %v1051 = vld [vmem:[#allocation6 + $0x48] sm:$0xff]
        %v1052 = vld [vmem:[#allocation6 + $0x50] sm:$0xff]
        %v1053 = vld [vmem:[#allocation6 + $0x58] sm:$0xff]
        %v1054 = vld [vmem:[#allocation6 + $0x60] sm:$0xff]
        %v1055 = vld [vmem:[#allocation6 + $0x68] sm:$0xff]
        %v1056 = vld [vmem:[#allocation6 + $0x70] sm:$0xff]
        %v1057 = vld [vmem:[#allocation6 + $0x78] sm:$0xff]
        %v1058 = vld [vmem:[#allocation6 + $0x80] sm:$0xff]
        %v1059 = vld [vmem:[#allocation6 + $0x88] sm:$0xff]
        %v1060 = vld [vmem:[#allocation6 + $0x90] sm:$0xff]
        %v1061 = vld [vmem:[#allocation6 + $0x98] sm:$0xff]
        %v1062 = vld [vmem:[#allocation6 + $0xa0] sm:$0xff]
        %v1063 = vld [vmem:[#allocation6 + $0xa8] sm:$0xff]
        %v1064 = vld [vmem:[#allocation6 + $0xb0] sm:$0xff]
        %v1065 = vld [vmem:[#allocation6 + $0xb8] sm:$0xff]
        %v1066 = vld [vmem:[#allocation6 + $0xc0] sm:$0xff]
        %v1067 = vld [vmem:[#allocation6 + $0xc8] sm:$0xff]
        %v1068 = vld [vmem:[#allocation6 + $0xd0] sm:$0xff]
        %v1069 = vld [vmem:[#allocation6 + $0xd8] sm:$0xff]
        %v1070 = vld [vmem:[#allocation6 + $0xe0] sm:$0xff]
        %v1071 = vld [vmem:[#allocation6 + $0xe8] sm:$0xff]
        %v1072 = vld [vmem:[#allocation6 + $0xf0] sm:$0xff]
        %v1073 = vld [vmem:[#allocation6 + $0xf8] sm:$0xff]
        %v1074 = vld [vmem:[#allocation6 + $0x100] sm:$0xff]
        %v1075 = vld [vmem:[#allocation6 + $0x108] sm:$0xff]
        %v1076 = vld [vmem:[#allocation6 + $0x110] sm:$0xff]
        %v1077 = vld [vmem:[#allocation6 + $0x118] sm:$0xff]
        %v1078 = vld [vmem:[#allocation6 + $0x120] sm:$0xff]
        %v1079 = vld [vmem:[#allocation6 + $0x128] sm:$0xff]
        %v1080 = vld [vmem:[#allocation6 + $0x130] sm:$0xff]
        %v1081 = vld [vmem:[#allocation6 + $0x138] sm:$0xff]
        %v1082 = vld [vmem:[#allocation6 + $0x140] sm:$0xff]
        %v1083 = vld [vmem:[#allocation6 + $0x148] sm:$0xff]
        %v1084 = vld [vmem:[#allocation6 + $0x150] sm:$0xff]
        %v1085 = vld [vmem:[#allocation6 + $0x158] sm:$0xff]
        %v1086 = vld [vmem:[#allocation6 + $0x160] sm:$0xff]
        %v1087 = vld [vmem:[#allocation6 + $0x168] sm:$0xff]
        %v1088 = vld [vmem:[#allocation6 + $0x170] sm:$0xff]
        %v1089 = vld [vmem:[#allocation6 + $0x178] sm:$0xff]
        %v1090 = vld [vmem:[%s6] sm:$0x1]
        %v1092 = vlaneseq
        %v1093 = vshrl.u32 %v1092, 7
        %v1094 = vsub.s32 0, %v1093
        %v1095 = vrot.slane %v1090, %v1094
        %1097 = vmatprep.subr.mxu0 0.0
        %1098 = vmatpush1.msra.mxu0 %v1042
        %1099 = vmatprep.subr.mxu0 0.0
        %1100 = vmatpush1.msra.mxu0 %v1043
        %1101 = vmatprep.subr.mxu0 0.0
        %1102 = vmatpush1.msra.mxu0 %v1044
        %1103 = vmatprep.subr.mxu0 0.0
        %1104 = vmatpush1.msra.mxu0 %v1045
        %1105 = vmatprep.subr.mxu0 0.0
        %1106 = vmatpush1.msra.mxu0 %v1046
        %1107 = vmatprep.subr.mxu0 0.0
        %1108 = vmatpush1.msra.mxu0 %v1047
        %1109 = vmatprep.subr.mxu0 0.0
        %1110 = vmatpush1.msra.mxu0 %v1048
        %1111 = vmatprep.subr.mxu0 0.0
        %1112 = vmatpush1.msra.mxu0 %v1049
        %1113 = vmatprep.subr.mxu0 0.0
        %1114 = vmatpush1.msra.mxu0 %v1050
        %1115 = vmatprep.subr.mxu0 0.0
        %1116 = vmatpush1.msra.mxu0 %v1051
        %1117 = vmatprep.subr.mxu0 0.0
        %1118 = vmatpush1.msra.mxu0 %v1052
        %1119 = vmatprep.subr.mxu0 0.0
        %1120 = vmatpush1.msra.mxu0 %v1053
        %1121 = vmatprep.subr.mxu0 0.0
        %1122 = vmatpush1.msra.mxu0 %v1054
        %1123 = vmatprep.subr.mxu0 0.0
        %1124 = vmatpush1.msra.mxu0 %v1055
        %1125 = vmatprep.subr.mxu0 0.0
        %1126 = vmatpush1.msra.mxu0 %v1056
        %1127 = vmatprep.subr.mxu0 0.0
        %1128 = vmatpush1.msra.mxu0 %v1057
        %1129 = vmatprep.subr.mxu0 0.0
        %1130 = vmatpush1.msra.mxu0 %v1058
        %1131 = vmatprep.subr.mxu0 0.0
        %1132 = vmatpush1.msra.mxu0 %v1059
        %1133 = vmatprep.subr.mxu0 0.0
        %1134 = vmatpush1.msra.mxu0 %v1060
        %1135 = vmatprep.subr.mxu0 0.0
        %1136 = vmatpush1.msra.mxu0 %v1061
        %1137 = vmatprep.subr.mxu0 0.0
        %1138 = vmatpush1.msra.mxu0 %v1062
        %1139 = vmatprep.subr.mxu0 0.0
        %1140 = vmatpush1.msra.mxu0 %v1063
        %1141 = vmatprep.subr.mxu0 0.0
        %1142 = vmatpush1.msra.mxu0 %v1064
        %1143 = vmatprep.subr.mxu0 0.0
        %1144 = vmatpush1.msra.mxu0 %v1065
        %1145 = vmatprep.subr.mxu0 0.0
        %1146 = vmatpush1.msra.mxu0 %v1066
        %1147 = vmatprep.subr.mxu0 0.0
        %1148 = vmatpush1.msra.mxu0 %v1067
        %1149 = vmatprep.subr.mxu0 0.0
        %1150 = vmatpush1.msra.mxu0 %v1068
        %1151 = vmatprep.subr.mxu0 0.0
        %1152 = vmatpush1.msra.mxu0 %v1069
        %1153 = vmatprep.subr.mxu0 0.0
        %1154 = vmatpush1.msra.mxu0 %v1070
        %1155 = vmatprep.subr.mxu0 0.0
        %1156 = vmatpush1.msra.mxu0 %v1071
        %1157 = vmatprep.subr.mxu0 0.0
        %1158 = vmatpush1.msra.mxu0 %v1072
        %1159 = vmatprep.subr.mxu0 0.0
        %1160 = vmatpush1.msra.mxu0 %v1073
        %1161 = vmatprep.mubr.f32.mxu0 %v1038
        %1162 = vmatmul.mubr.f32.gmra.mrb[0].mxu0 %v1026
        %v1163 = vpop.f32.mrb[0].mxu0
        %v1164 = vadd.f32 %v1095, %v1163
        %v1165 = vpop.f32.mrb[0].mxu0
        %1166 = vmatprep.mubr.f32.mxu0 %v1039
        %1167 = vmatmul.mubr.f32.gmra.mrb[0].mxu0 %v1027
        %v1168 = vpop.f32.mrb[0].mxu0
        %v1169 = vadd.f32 %v1095, %v1168
        %v1170 = vpop.f32.mrb[0].mxu0
        %1171 = vmatprep.mubr.f32.mxu0 %v1040
        %1172 = vmatmul.mubr.f32.gmra.mrb[0].mxu0 %v1028
        %v1173 = vpop.f32.mrb[0].mxu0
        %v1174 = vadd.f32 %v1095, %v1173
        %v1175 = vpop.f32.mrb[0].mxu0
        %1176 = vmatprep.mubr.f32.mxu0 %v1041
        %1177 = vmatmul.mubr.f32.gmra.mrb[0].mxu0 %v1029
        %v1178 = vpop.f32.mrb[0].mxu0
        %v1179 = vadd.f32 %v1095, %v1178
        %v1180 = vpop.f32.mrb[0].mxu0
        %1181 = vdwg.mxu0
        %1182 = vmatprep.subr.mxu0 0.0
        %1183 = vmatpush1.msra.mxu0 %v1074
        %1184 = vmatprep.subr.mxu0 0.0
        %1185 = vmatpush1.msra.mxu0 %v1075
        %1186 = vmatprep.subr.mxu0 0.0
        %1187 = vmatpush1.msra.mxu0 %v1076
        %1188 = vmatprep.subr.mxu0 0.0
        %1189 = vmatpush1.msra.mxu0 %v1077
        %1190 = vmatprep.subr.mxu0 0.0
        %1191 = vmatpush1.msra.mxu0 %v1078
        %1192 = vmatprep.subr.mxu0 0.0
        %1193 = vmatpush1.msra.mxu0 %v1079
        %1194 = vmatprep.subr.mxu0 0.0
        %1195 = vmatpush1.msra.mxu0 %v1080
        %1196 = vmatprep.subr.mxu0 0.0
        %1197 = vmatpush1.msra.mxu0 %v1081
        %1198 = vmatprep.subr.mxu0 0.0
        %1199 = vmatpush1.msra.mxu0 %v1082
        %1200 = vmatprep.subr.mxu0 0.0
        %1201 = vmatpush1.msra.mxu0 %v1083
        %1202 = vmatprep.subr.mxu0 0.0
        %1203 = vmatpush1.msra.mxu0 %v1084
        %1204 = vmatprep.subr.mxu0 0.0
        %1205 = vmatpush1.msra.mxu0 %v1085
        %1206 = vmatprep.subr.mxu0 0.0
        %1207 = vmatpush1.msra.mxu0 %v1086
        %1208 = vmatprep.subr.mxu0 0.0
        %1209 = vmatpush1.msra.mxu0 %v1087
        %1210 = vmatprep.subr.mxu0 0.0
        %1211 = vmatpush1.msra.mxu0 %v1088
        %1212 = vmatprep.subr.mxu0 0.0
        %1213 = vmatpush1.msra.mxu0 %v1089
        %1214 = vmatprep.subr.mxu0 0.0
        %1215 = vmatpush1.msra.mxu0 0.0
        %1216 = vmatprep.subr.mxu0 0.0
        %1217 = vmatpush1.msra.mxu0 0.0
        %1218 = vmatprep.subr.mxu0 0.0
        %1219 = vmatpush1.msra.mxu0 0.0
        %1220 = vmatprep.subr.mxu0 0.0
        %1221 = vmatpush1.msra.mxu0 0.0
        %1222 = vmatprep.subr.mxu0 0.0
        %1223 = vmatpush1.msra.mxu0 0.0
        %1224 = vmatprep.subr.mxu0 0.0
        %1225 = vmatpush1.msra.mxu0 0.0
        %1226 = vmatprep.subr.mxu0 0.0
        %1227 = vmatpush1.msra.mxu0 0.0
        %1228 = vmatprep.subr.mxu0 0.0
        %1229 = vmatpush1.msra.mxu0 0.0
        %1230 = vmatprep.subr.mxu0 0.0
        %1231 = vmatpush1.msra.mxu0 0.0
        %1232 = vmatprep.subr.mxu0 0.0
        %1233 = vmatpush1.msra.mxu0 0.0
        %1234 = vmatprep.subr.mxu0 0.0
        %1235 = vmatpush1.msra.mxu0 0.0
        %1236 = vmatprep.subr.mxu0 0.0
        %1237 = vmatpush1.msra.mxu0 0.0
        %1238 = vmatprep.subr.mxu0 0.0
        %1239 = vmatpush1.msra.mxu0 0.0
        %1240 = vmatprep.subr.mxu0 0.0
        %1241 = vmatpush1.msra.mxu0 0.0
        %1242 = vmatprep.subr.mxu0 0.0
        %1243 = vmatpush1.msra.mxu0 0.0
        %1244 = vmatprep.subr.mxu0 0.0
        %1245 = vmatpush1.msra.mxu0 0.0
        %1246 = vmatprep.mubr.f32.mxu0 0.0
        %1247 = vmatmul.mubr.f32.gmra.mrb[0].mxu0 %v1001
        %v1248 = vpop.f32.mrb[0].mxu0
        %v1249 = vadd.f32 %v1164, %v1248
        %v1250 = vpop.f32.mrb[0].mxu0
        %1251 = vmatprep.mubr.f32.mxu0 0.0
        %1252 = vmatmul.mubr.f32.gmra.mrb[0].mxu0 %v1002
        %v1253 = vpop.f32.mrb[0].mxu0
        %v1254 = vadd.f32 %v1169, %v1253
        %v1255 = vpop.f32.mrb[0].mxu0
        %1256 = vmatprep.mubr.f32.mxu0 0.0
        %1257 = vmatmul.mubr.f32.gmra.mrb[0].mxu0 %v1003
        %v1258 = vpop.f32.mrb[0].mxu0
        %v1259 = vadd.f32 %v1174, %v1258
        %v1260 = vpop.f32.mrb[0].mxu0
        %1261 = vmatprep.mubr.f32.mxu0 0.0
        %1262 = vmatmul.mubr.f32.gmra.mrb[0].mxu0 %v1004
        %v1263 = vpop.f32.mrb[0].mxu0
        %v1264 = vadd.f32 %v1179, %v1263
        %v1265 = vpop.f32.mrb[0].mxu0
        %1266 = vdwg.mxu0
        %v1267 = vmax.f32 %v1249, 0.0
        %v1268 = vmax.f32 %v1254, 0.0
        %v1269 = vmax.f32 %v1259, 0.0
        %v1270 = vmax.f32 %v1264, 0.0
        %v1271 = vrot.slane %v1267, 4
        %v1272 = vrot.slane %v1268, 4
        %v1273 = vrot.slane %v1269, 4
        %v1274 = vrot.slane %v1270, 4
        %v1275 = vsel %vm1021, %v1273, %v1274
        %v1276 = vsel %vm1021, %v1272, %v1273
        %v1277 = vsel %vm1021, %v1271, %v1272
        %v1278 = vsel %vm1021, %v1274, %v1271
        %v1279 = vmul.f32 %v1278, %v1013
        %v1280 = vmul.f32 %v1277, %v1014
        %v1281 = vmul.f32 %v1276, %v1015
        %v1282 = vmul.f32 %v1275, %v1016
        %v1283 = vrot.slane %v1267, 6
        %v1284 = vrot.slane %v1268, 6
        %v1285 = vrot.slane %v1269, 6
        %v1286 = vrot.slane %v1270, 6
        %v1287 = vsel %vm497, %v1285, %v1286
        %v1288 = vsel %vm497, %v1284, %v1285
        %v1289 = vsel %vm497, %v1283, %v1284
        %v1290 = vsel %vm497, %v1286, %v1283
        %v1291 = vmul.f32 %v1290, %v477
        %v1292 = vmul.f32 %v1289, %v478
        %v1293 = vmul.f32 %v1288, %v479
        %v1294 = vmul.f32 %v1287, %v480
        %v1295 = vld [vmem:[#allocation7] sm:$0xff]
        %v1296 = vld [vmem:[#allocation7 + $0x8] sm:$0xff]
        %v1297 = vld [vmem:[#allocation7 + $0x10] sm:$0xff]
        %v1298 = vld [vmem:[#allocation7 + $0x18] sm:$0xff]
        %v1299 = vld [vmem:[#allocation7 + $0x20] sm:$0xff]
        %v1300 = vld [vmem:[#allocation7 + $0x28] sm:$0xff]
        %v1301 = vld [vmem:[#allocation7 + $0x30] sm:$0xff]
        %v1302 = vld [vmem:[#allocation7 + $0x38] sm:$0xff]
        %v1303 = vld [vmem:[#allocation7 + $0x40] sm:$0xff]
        %v1304 = vld [vmem:[#allocation7 + $0x48] sm:$0xff]
        %v1305 = vld [vmem:[#allocation7 + $0x50] sm:$0xff]
        %v1306 = vld [vmem:[#allocation7 + $0x58] sm:$0xff]
        %v1307 = vld [vmem:[#allocation7 + $0x60] sm:$0xff]
        %v1308 = vld [vmem:[#allocation7 + $0x68] sm:$0xff]
        %v1309 = vld [vmem:[#allocation7 + $0x70] sm:$0xff]
        %v1310 = vld [vmem:[#allocation7 + $0x78] sm:$0xff]
        %v1311 = vld [vmem:[#allocation7 + $0x80] sm:$0xff]
        %v1312 = vld [vmem:[#allocation7 + $0x88] sm:$0xff]
        %v1313 = vld [vmem:[#allocation7 + $0x90] sm:$0xff]
        %v1314 = vld [vmem:[#allocation7 + $0x98] sm:$0xff]
        %v1315 = vld [vmem:[#allocation7 + $0xa0] sm:$0xff]
        %v1316 = vld [vmem:[#allocation7 + $0xa8] sm:$0xff]
        %v1317 = vld [vmem:[#allocation7 + $0xb0] sm:$0xff]
        %v1318 = vld [vmem:[#allocation7 + $0xb8] sm:$0xff]
        %v1319 = vld [vmem:[#allocation7 + $0xc0] sm:$0xff]
        %v1320 = vld [vmem:[#allocation7 + $0xc8] sm:$0xff]
        %v1321 = vld [vmem:[#allocation7 + $0xd0] sm:$0xff]
        %v1322 = vld [vmem:[#allocation7 + $0xd8] sm:$0xff]
        %v1323 = vld [vmem:[#allocation7 + $0xe0] sm:$0xff]
        %v1324 = vld [vmem:[#allocation7 + $0xe8] sm:$0xff]
        %v1325 = vld [vmem:[#allocation7 + $0xf0] sm:$0xff]
        %v1326 = vld [vmem:[#allocation7 + $0xf8] sm:$0xff]
        %v1327 = vld [vmem:[#allocation7 + $0x100] sm:$0xff]
        %v1328 = vld [vmem:[#allocation7 + $0x108] sm:$0xff]
        %v1329 = vld [vmem:[#allocation7 + $0x110] sm:$0xff]
        %v1330 = vld [vmem:[#allocation7 + $0x118] sm:$0xff]
        %v1331 = vld [vmem:[#allocation7 + $0x120] sm:$0xff]
        %v1332 = vld [vmem:[#allocation7 + $0x128] sm:$0xff]
        %v1333 = vld [vmem:[#allocation7 + $0x130] sm:$0xff]
        %v1334 = vld [vmem:[#allocation7 + $0x138] sm:$0xff]
        %v1335 = vld [vmem:[#allocation7 + $0x140] sm:$0xff]
        %v1336 = vld [vmem:[#allocation7 + $0x148] sm:$0xff]
        %v1337 = vld [vmem:[#allocation7 + $0x150] sm:$0xff]
        %v1338 = vld [vmem:[#allocation7 + $0x158] sm:$0xff]
        %v1339 = vld [vmem:[#allocation7 + $0x160] sm:$0xff]
        %v1340 = vld [vmem:[#allocation7 + $0x168] sm:$0xff]
        %v1341 = vld [vmem:[#allocation7 + $0x170] sm:$0xff]
        %v1342 = vld [vmem:[#allocation7 + $0x178] sm:$0xff]
        %v1343 = vld [vmem:[%s8] sm:$0x1]
        %v1345 = vlaneseq
        %v1346 = vshrl.u32 %v1345, 7
        %v1347 = vsub.s32 0, %v1346
        %v1348 = vrot.slane %v1343, %v1347
        %1350 = vmatprep.subr.mxu0 0.0
        %1351 = vmatpush1.msra.mxu0 %v1295
        %1352 = vmatprep.subr.mxu0 0.0
        %1353 = vmatpush1.msra.mxu0 %v1296
        %1354 = vmatprep.subr.mxu0 0.0
        %1355 = vmatpush1.msra.mxu0 %v1297
        %1356 = vmatprep.subr.mxu0 0.0
        %1357 = vmatpush1.msra.mxu0 %v1298
        %1358 = vmatprep.subr.mxu0 0.0
        %1359 = vmatpush1.msra.mxu0 %v1299
        %1360 = vmatprep.subr.mxu0 0.0
        %1361 = vmatpush1.msra.mxu0 %v1300
        %1362 = vmatprep.subr.mxu0 0.0
        %1363 = vmatpush1.msra.mxu0 %v1301
        %1364 = vmatprep.subr.mxu0 0.0
        %1365 = vmatpush1.msra.mxu0 %v1302
        %1366 = vmatprep.subr.mxu0 0.0
        %1367 = vmatpush1.msra.mxu0 %v1303
        %1368 = vmatprep.subr.mxu0 0.0
        %1369 = vmatpush1.msra.mxu0 %v1304
        %1370 = vmatprep.subr.mxu0 0.0
        %1371 = vmatpush1.msra.mxu0 %v1305
        %1372 = vmatprep.subr.mxu0 0.0
        %1373 = vmatpush1.msra.mxu0 %v1306
        %1374 = vmatprep.subr.mxu0 0.0
        %1375 = vmatpush1.msra.mxu0 %v1307
        %1376 = vmatprep.subr.mxu0 0.0
        %1377 = vmatpush1.msra.mxu0 %v1308
        %1378 = vmatprep.subr.mxu0 0.0
        %1379 = vmatpush1.msra.mxu0 %v1309
        %1380 = vmatprep.subr.mxu0 0.0
        %1381 = vmatpush1.msra.mxu0 %v1310
        %1382 = vmatprep.subr.mxu0 0.0
        %1383 = vmatpush1.msra.mxu0 %v1311
        %1384 = vmatprep.subr.mxu0 0.0
        %1385 = vmatpush1.msra.mxu0 %v1312
        %1386 = vmatprep.subr.mxu0 0.0
        %1387 = vmatpush1.msra.mxu0 %v1313
        %1388 = vmatprep.subr.mxu0 0.0
        %1389 = vmatpush1.msra.mxu0 %v1314
        %1390 = vmatprep.subr.mxu0 0.0
        %1391 = vmatpush1.msra.mxu0 %v1315
        %1392 = vmatprep.subr.mxu0 0.0
        %1393 = vmatpush1.msra.mxu0 %v1316
        %1394 = vmatprep.subr.mxu0 0.0
        %1395 = vmatpush1.msra.mxu0 %v1317
        %1396 = vmatprep.subr.mxu0 0.0
        %1397 = vmatpush1.msra.mxu0 %v1318
        %1398 = vmatprep.subr.mxu0 0.0
        %1399 = vmatpush1.msra.mxu0 %v1319
        %1400 = vmatprep.subr.mxu0 0.0
        %1401 = vmatpush1.msra.mxu0 %v1320
        %1402 = vmatprep.subr.mxu0 0.0
        %1403 = vmatpush1.msra.mxu0 %v1321
        %1404 = vmatprep.subr.mxu0 0.0
        %1405 = vmatpush1.msra.mxu0 %v1322
        %1406 = vmatprep.subr.mxu0 0.0
        %1407 = vmatpush1.msra.mxu0 %v1323
        %1408 = vmatprep.subr.mxu0 0.0
        %1409 = vmatpush1.msra.mxu0 %v1324
        %1410 = vmatprep.subr.mxu0 0.0
        %1411 = vmatpush1.msra.mxu0 %v1325
        %1412 = vmatprep.subr.mxu0 0.0
        %1413 = vmatpush1.msra.mxu0 %v1326
        %1414 = vmatprep.mubr.f32.mxu0 %v1291
        %1415 = vmatmul.mubr.f32.gmra.mrb[0].mxu0 %v1279
        %v1416 = vpop.f32.mrb[0].mxu0
        %v1417 = vadd.f32 %v1348, %v1416
        %v1418 = vpop.f32.mrb[0].mxu0
        %1419 = vmatprep.mubr.f32.mxu0 %v1292
        %1420 = vmatmul.mubr.f32.gmra.mrb[0].mxu0 %v1280
        %v1421 = vpop.f32.mrb[0].mxu0
        %v1422 = vadd.f32 %v1348, %v1421
        %v1423 = vpop.f32.mrb[0].mxu0
        %1424 = vmatprep.mubr.f32.mxu0 %v1293
        %1425 = vmatmul.mubr.f32.gmra.mrb[0].mxu0 %v1281
        %v1426 = vpop.f32.mrb[0].mxu0
        %v1427 = vadd.f32 %v1348, %v1426
        %v1428 = vpop.f32.mrb[0].mxu0
        %1429 = vmatprep.mubr.f32.mxu0 %v1294
        %1430 = vmatmul.mubr.f32.gmra.mrb[0].mxu0 %v1282
        %v1431 = vpop.f32.mrb[0].mxu0
        %v1432 = vadd.f32 %v1348, %v1431
        %v1433 = vpop.f32.mrb[0].mxu0
        %1434 = vdwg.mxu0
        %1435 = vmatprep.subr.mxu0 0.0
        %1436 = vmatpush1.msra.mxu0 %v1327
        %1437 = vmatprep.subr.mxu0 0.0
        %1438 = vmatpush1.msra.mxu0 %v1328
        %1439 = vmatprep.subr.mxu0 0.0
        %1440 = vmatpush1.msra.mxu0 %v1329
        %1441 = vmatprep.subr.mxu0 0.0
        %1442 = vmatpush1.msra.mxu0 %v1330
        %1443 = vmatprep.subr.mxu0 0.0
        %1444 = vmatpush1.msra.mxu0 %v1331
        %1445 = vmatprep.subr.mxu0 0.0
        %1446 = vmatpush1.msra.mxu0 %v1332
        %1447 = vmatprep.subr.mxu0 0.0
        %1448 = vmatpush1.msra.mxu0 %v1333
        %1449 = vmatprep.subr.mxu0 0.0
        %1450 = vmatpush1.msra.mxu0 %v1334
        %1451 = vmatprep.subr.mxu0 0.0
        %1452 = vmatpush1.msra.mxu0 %v1335
        %1453 = vmatprep.subr.mxu0 0.0
        %1454 = vmatpush1.msra.mxu0 %v1336
        %1455 = vmatprep.subr.mxu0 0.0
        %1456 = vmatpush1.msra.mxu0 %v1337
        %1457 = vmatprep.subr.mxu0 0.0
        %1458 = vmatpush1.msra.mxu0 %v1338
        %1459 = vmatprep.subr.mxu0 0.0
        %1460 = vmatpush1.msra.mxu0 %v1339
        %1461 = vmatprep.subr.mxu0 0.0
        %1462 = vmatpush1.msra.mxu0 %v1340
        %1463 = vmatprep.subr.mxu0 0.0
        %1464 = vmatpush1.msra.mxu0 %v1341
        %1465 = vmatprep.subr.mxu0 0.0
        %1466 = vmatpush1.msra.mxu0 %v1342
        %1467 = vmatprep.subr.mxu0 0.0
        %1468 = vmatpush1.msra.mxu0 0.0
        %1469 = vmatprep.subr.mxu0 0.0
        %1470 = vmatpush1.msra.mxu0 0.0
        %1471 = vmatprep.subr.mxu0 0.0
        %1472 = vmatpush1.msra.mxu0 0.0
        %1473 = vmatprep.subr.mxu0 0.0
        %1474 = vmatpush1.msra.mxu0 0.0
        %1475 = vmatprep.subr.mxu0 0.0
        %1476 = vmatpush1.msra.mxu0 0.0
        %1477 = vmatprep.subr.mxu0 0.0
        %1478 = vmatpush1.msra.mxu0 0.0
        %1479 = vmatprep.subr.mxu0 0.0
        %1480 = vmatpush1.msra.mxu0 0.0
        %1481 = vmatprep.subr.mxu0 0.0
        %1482 = vmatpush1.msra.mxu0 0.0
        %1483 = vmatprep.subr.mxu0 0.0
        %1484 = vmatpush1.msra.mxu0 0.0
        %1485 = vmatprep.subr.mxu0 0.0
        %1486 = vmatpush1.msra.mxu0 0.0
        %1487 = vmatprep.subr.mxu0 0.0
        %1488 = vmatpush1.msra.mxu0 0.0
        %1489 = vmatprep.subr.mxu0 0.0
        %1490 = vmatpush1.msra.mxu0 0.0
        %1491 = vmatprep.subr.mxu0 0.0
        %1492 = vmatpush1.msra.mxu0 0.0
        %1493 = vmatprep.subr.mxu0 0.0
        %1494 = vmatpush1.msra.mxu0 0.0
        %1495 = vmatprep.subr.mxu0 0.0
        %1496 = vmatpush1.msra.mxu0 0.0
        %1497 = vmatprep.subr.mxu0 0.0
        %1498 = vmatpush1.msra.mxu0 0.0
        %1499 = vmatprep.mubr.f32.mxu0 0.0
        %1500 = vmatmul.mubr.f32.gmra.mrb[0].mxu0 %v1267
        %v1501 = vpop.f32.mrb[0].mxu0
        %v1502 = vadd.f32 %v1417, %v1501
        %v1503 = vpop.f32.mrb[0].mxu0
        %1504 = vmatprep.mubr.f32.mxu0 0.0
        %1505 = vmatmul.mubr.f32.gmra.mrb[0].mxu0 %v1268
        %v1506 = vpop.f32.mrb[0].mxu0
        %v1507 = vadd.f32 %v1422, %v1506
        %v1508 = vpop.f32.mrb[0].mxu0
        %1509 = vmatprep.mubr.f32.mxu0 0.0
        %1510 = vmatmul.mubr.f32.gmra.mrb[0].mxu0 %v1269
        %v1511 = vpop.f32.mrb[0].mxu0
        %v1512 = vadd.f32 %v1427, %v1511
        %v1513 = vpop.f32.mrb[0].mxu0
        %1514 = vmatprep.mubr.f32.mxu0 0.0
        %1515 = vmatmul.mubr.f32.gmra.mrb[0].mxu0 %v1270
        %v1516 = vpop.f32.mrb[0].mxu0
        %v1517 = vadd.f32 %v1432, %v1516
        %v1518 = vpop.f32.mrb[0].mxu0
        %1519 = vdwg.mxu0
        %v1520 = vld [vmem:[%s9] sm:$0xff]
        %v1521 = vld [vmem:[%s9 + $0x8] sm:$0xff]
        %v1522 = vld [vmem:[%s9 + $0x10] sm:$0xff]
        %v1523 = vld [vmem:[%s9 + $0x18] sm:$0xff]
        %v1524 = vld [vmem:[%s9 + $0x20] sm:$0xff]
        %v1525 = vld [vmem:[%s9 + $0x28] sm:$0xff]
        %v1526 = vld [vmem:[%s9 + $0x30] sm:$0xff]
        %v1527 = vld [vmem:[%s9 + $0x38] sm:$0xff]
        %v1528 = vld [vmem:[%s9 + $0x40] sm:$0xff]
        %v1529 = vld [vmem:[%s9 + $0x48] sm:$0xff]
        %v1530 = vld [vmem:[%s9 + $0x50] sm:$0xff]
        %v1531 = vld [vmem:[%s9 + $0x58] sm:$0xff]
        %v1532 = vld [vmem:[%s9 + $0x60] sm:$0xff]
        %v1533 = vld [vmem:[%s9 + $0x68] sm:$0xff]
        %v1534 = vld [vmem:[%s9 + $0x70] sm:$0xff]
        %v1535 = vld [vmem:[%s9 + $0x78] sm:$0xff]
        %v1536 = vld [vmem:[%s10] sm:$0x1]
        %v1538 = vlaneseq
        %v1539 = vshrl.u32 %v1538, 7
        %v1540 = vsub.s32 0, %v1539
        %v1541 = vrot.slane %v1536, %v1540
        %1543 = vmatprep.subr.mxu0 0.0
        %1544 = vmatpush1.msra.mxu0 %v1520
        %1545 = vmatprep.subr.mxu0 0.0
        %1546 = vmatpush1.msra.mxu0 %v1521
        %1547 = vmatprep.subr.mxu0 0.0
        %1548 = vmatpush1.msra.mxu0 %v1522
        %1549 = vmatprep.subr.mxu0 0.0
        %1550 = vmatpush1.msra.mxu0 %v1523
        %1551 = vmatprep.subr.mxu0 0.0
        %1552 = vmatpush1.msra.mxu0 %v1524
        %1553 = vmatprep.subr.mxu0 0.0
        %1554 = vmatpush1.msra.mxu0 %v1525
        %1555 = vmatprep.subr.mxu0 0.0
        %1556 = vmatpush1.msra.mxu0 %v1526
        %1557 = vmatprep.subr.mxu0 0.0
        %1558 = vmatpush1.msra.mxu0 %v1527
        %1559 = vmatprep.subr.mxu0 0.0
        %1560 = vmatpush1.msra.mxu0 %v1528
        %1561 = vmatprep.subr.mxu0 0.0
        %1562 = vmatpush1.msra.mxu0 %v1529
        %1563 = vmatprep.subr.mxu0 0.0
        %1564 = vmatpush1.msra.mxu0 %v1530
        %1565 = vmatprep.subr.mxu0 0.0
        %1566 = vmatpush1.msra.mxu0 %v1531
        %1567 = vmatprep.subr.mxu0 0.0
        %1568 = vmatpush1.msra.mxu0 %v1532
        %1569 = vmatprep.subr.mxu0 0.0
        %1570 = vmatpush1.msra.mxu0 %v1533
        %1571 = vmatprep.subr.mxu0 0.0
        %1572 = vmatpush1.msra.mxu0 %v1534
        %1573 = vmatprep.subr.mxu0 0.0
        %1574 = vmatpush1.msra.mxu0 %v1535
        %1575 = vmatprep.subr.mxu0 0.0
        %1576 = vmatpush1.msra.mxu0 0.0
        %1577 = vmatprep.subr.mxu0 0.0
        %1578 = vmatpush1.msra.mxu0 0.0
        %1579 = vmatprep.subr.mxu0 0.0
        %1580 = vmatpush1.msra.mxu0 0.0
        %1581 = vmatprep.subr.mxu0 0.0
        %1582 = vmatpush1.msra.mxu0 0.0
        %1583 = vmatprep.subr.mxu0 0.0
        %1584 = vmatpush1.msra.mxu0 0.0
        %1585 = vmatprep.subr.mxu0 0.0
        %1586 = vmatpush1.msra.mxu0 0.0
        %1587 = vmatprep.subr.mxu0 0.0
        %1588 = vmatpush1.msra.mxu0 0.0
        %1589 = vmatprep.subr.mxu0 0.0
        %1590 = vmatpush1.msra.mxu0 0.0
        %1591 = vmatprep.subr.mxu0 0.0
        %1592 = vmatpush1.msra.mxu0 0.0
        %1593 = vmatprep.subr.mxu0 0.0
        %1594 = vmatpush1.msra.mxu0 0.0
        %1595 = vmatprep.subr.mxu0 0.0
        %1596 = vmatpush1.msra.mxu0 0.0
        %1597 = vmatprep.subr.mxu0 0.0
        %1598 = vmatpush1.msra.mxu0 0.0
        %1599 = vmatprep.subr.mxu0 0.0
        %1600 = vmatpush1.msra.mxu0 0.0
        %1601 = vmatprep.subr.mxu0 0.0
        %1602 = vmatpush1.msra.mxu0 0.0
        %1603 = vmatprep.subr.mxu0 0.0
        %1604 = vmatpush1.msra.mxu0 0.0
        %1605 = vmatprep.subr.mxu0 0.0
        %1606 = vmatpush1.msra.mxu0 0.0
        %1607 = vmatprep.mubr.f32.mxu0 0.0
        %1608 = vmatmul.mubr.f32.gmra.mrb[0].mxu0 %v1001
        %v1609 = vpop.f32.mrb[0].mxu0
        %v1610 = vadd.f32 %v1541, %v1609
        %v1611 = vpop.f32.mrb[0].mxu0
        %1612 = vmatprep.mubr.f32.mxu0 0.0
        %1613 = vmatmul.mubr.f32.gmra.mrb[0].mxu0 %v1002
        %v1614 = vpop.f32.mrb[0].mxu0
        %v1615 = vadd.f32 %v1541, %v1614
        %v1616 = vpop.f32.mrb[0].mxu0
        %1617 = vmatprep.mubr.f32.mxu0 0.0
        %1618 = vmatmul.mubr.f32.gmra.mrb[0].mxu0 %v1003
        %v1619 = vpop.f32.mrb[0].mxu0
        %v1620 = vadd.f32 %v1541, %v1619
        %v1621 = vpop.f32.mrb[0].mxu0
        %1622 = vmatprep.mubr.f32.mxu0 0.0
        %1623 = vmatmul.mubr.f32.gmra.mrb[0].mxu0 %v1004
        %v1624 = vpop.f32.mrb[0].mxu0
        %v1625 = vadd.f32 %v1541, %v1624
        %v1626 = vpop.f32.mrb[0].mxu0
        %1627 = vdwg.mxu0
        %v1628 = vadd.f32 %v1502, %v1610
        %v1629 = vadd.f32 %v1507, %v1615
        %v1630 = vadd.f32 %v1512, %v1620
        %v1631 = vadd.f32 %v1517, %v1625
        %v1632 = vmax.f32 %v1628, 0.0
        %v1633 = vmax.f32 %v1629, 0.0
        %v1634 = vmax.f32 %v1630, 0.0
        %v1635 = vmax.f32 %v1631, 0.0
        %1636 = vst [vmem:[%s447] sm:$0xff] %v1632
        %1637 = vst [vmem:[%s447 + $0x8] sm:$0xff] %v1633
        %1638 = vst [vmem:[%s447 + $0x10] sm:$0xff] %v1634
        %1639 = vst [vmem:[%s447 + $0x18] sm:$0xff] %v1635
        %s1640 = smul.u32 4, %s25
        %p1641 = scmp.lt.s32.totalorder %s1640, 7
        %s1642 = scalar_select %p1641, %s1640, 7
        %s1643 = smul.addr %s1642, 8
        %s1644 = scalar_lea.vmem %s11, %s1643
        // Predicated region
        $region81: #{_lambda_.1} parent=63 // pred_check
          %p1645 = pneg %p279
        $region82: #{_lambda_.1} parent=63 // pred_check_branch
          %1647 = sbr.rel (%p1645) target = $region84
        $region83: #{_lambda_.1} parent=63 // pred_region
          %s1648 = smul.u32 4, %s25
        $region84: #{_lambda_.1} parent=63 // pred_fallthru
          _
      $region64: #{_lambda_.1} parent=5 // pred_fallthru
        _
      %p1649 = scmp.le.s32.totalorder 2, %s20
      // Predicated region
      $region85: #{_lambda_.1} parent=5 // pred_check
        %p1650 = pneg %p1649
      $region86: #{_lambda_.1} parent=5 // pred_check_branch
        %1652 = sbr.rel (%p1650) target = $region88
      $region87: #{_lambda_.1} parent=5 // pred_region
        %s1653 = ssub.s32 %s20, 2
        // Predicated region
        $region89: #{_lambda_.1} parent=87 // pred_check
          %p1654 = pneg %p285
        $region90: #{_lambda_.1} parent=87 // pred_check_branch
          %1656 = sbr.rel (%p1654) target = $region92
        $region91: #{_lambda_.1} parent=87 // pred_region
          %s1657 = smul.u32 4, %s26
          %p1658 = scmp.lt.s32.totalorder %s1657, 7
          %s1659 = scalar_select %p1658, %s1657, 7
          %s1660 = smul.addr %s1659, 8
          %s1661 = scalar_lea.vmem %s11, %s1660
        $region92: #{_lambda_.1} parent=87 // pred_fallthru
          _
      $region88: #{_lambda_.1} parent=5 // pred_fallthru
        _
    $region6: #{_lambda_.1} parent=1 // loop_footer
      %s24 = sadd.s32 1, %s20
    $region7: #{_lambda_.1} parent=1 // loop_footer_branch
      %19 = sbr.rel target = $region3
    $region8: #{_lambda_.1} parent=1 // loop_exit
      _
    %1662 = vsyncpa [#allocation3], 1
    %s1663 = scalar_lea.sflag [#allocation3], 1
    %1664 = vsyncpa %s1663, 1
    %1665 = vsyncpa [#allocation5], 1
    %1666 = vsyncpa [#allocation8], 1

</llo_original>
